<compile_context>
chip_gen: v7x
topology: tpu7x:2x2x1
jax: 0.10.0
libtpu: 0.0.40
codegen_flags: <defaults>
</compile_context>

<pallas_src>
import functools

import jax
import jax.numpy as jnp
from jax.experimental import pallas as pl
from jax.experimental.pallas import tpu as pltpu


def _round_up(x, m):
    return (x + m - 1) // m * m


# ----------------------------- Pallas GEMM -----------------------------

def _resident_matmul_kernel(x_ref, w_ref, o_ref):
    """One (tm, tn) output tile; the full contraction dim is resident, so a
    single MXU pass produces the tile (no accumulator scratch, no K axis)."""
    o_ref[...] = jnp.dot(
        x_ref[...], w_ref[...], preferred_element_type=jnp.float32
    ).astype(o_ref.dtype)


def _pick_tm(M):
    # Largest convenient tile that still yields >= 2 M tiles so both v7x
    # TensorCores get work; a single tile only when M is tiny.
    for tm in (512, 256, 128, 64, 32, 16, 8):
        if tm <= M and pl.cdiv(M, tm) >= 2:
            return tm
    return _round_up(max(M, 1), 8)


def _pick_tn(Np, K, tm, out_bytes, budget):
    # Largest 128-multiple divisor of Np whose double-buffered blocks fit the
    # VMEM budget (lane-dense output stores; weight resident when tn == Np).
    for tn in range(Np, 127, -128):
        if Np % tn:
            continue
        need = 2 * tm * K * 2 + 2 * K * tn * 2 + 2 * tm * tn * out_bytes
        if need <= budget:
            return tn
    return 128


def pallas_patch_matmul(x, w, *, out_dtype=jnp.float32):
    """x: (M, K) bf16 @ w: (K, Np) bf16 -> (M, Np) out_dtype.

    K (= C * p^3) is small for patch embedding, so the contraction dim stays
    fully resident per tile: the grid is (M tiles, N tiles), both 'parallel'.
    """
    M, K = x.shape
    Kw, Np = w.shape
    assert K == Kw, (K, Kw)
    assert Np % 128 == 0, "weight must be lane-padded to a multiple of 128"

    out_bytes = jnp.dtype(out_dtype).itemsize
    budget = 24 << 20            # block budget safe on v7x's 64 MiB VMEM

    tm = _pick_tm(M)
    tn = _pick_tn(Np, K, tm, out_bytes, budget)
    while (2 * tm * K * 2 + 2 * K * tn * 2 + 2 * tm * tn * out_bytes > budget
           and tm > 8):
        tm //= 2                 # pathological K: shrink the M tile

    grid = (pl.cdiv(M, tm), Np // tn)
    block_bytes = 2 * tm * K * 2 + 2 * K * tn * 2 + 2 * tm * tn * out_bytes
    vmem_limit = min(max(block_bytes + (8 << 20), 32 << 20), 64 << 20)

    # Advisory traffic: A read once (N-inner loop reuses the A block), weight
    # re-streamed at most once per M tile, output written once.
    cost = pl.CostEstimate(
        flops=2 * M * Np * K,
        transcendentals=0,
        bytes_accessed=2 * M * K + 2 * K * Np * grid[0] + out_bytes * M * Np)

    return pl.pallas_call(
        _resident_matmul_kernel,
        out_shape=jax.ShapeDtypeStruct((M, Np), out_dtype),
        grid_spec=pltpu.PrefetchScalarGridSpec(
            num_scalar_prefetch=0,
            grid=grid,
            in_specs=[
                pl.BlockSpec((tm, K), lambda i, j: (i, 0)),
                pl.BlockSpec((K, tn), lambda i, j: (0, j)),
            ],
            out_specs=pl.BlockSpec((tm, tn), lambda i, j: (i, j)),
        ),
        compiler_params=pltpu.CompilerParams(
            dimension_semantics=("parallel", "parallel"),
            vmem_limit_bytes=vmem_limit),
        cost_estimate=cost,
    )(x, w)


# --------------------------- patch embedding ---------------------------

def prepare_patch_weight(w_oidhw, *, compute_dtype=jnp.bfloat16):
    """Torch Conv3d layout (embed_dim, C, p, p, p) -> bf16 (C*p^3, Np).

    Reshape/transpose, lane-pad N to a multiple of 128 and cast to bf16 ONCE
    at parameter-prep time so the per-call hot path does none of it.
    """
    embed_dim = w_oidhw.shape[0]
    w_kn = jnp.asarray(w_oidhw).reshape(embed_dim, -1).T          # (K, N)
    n_pad = _round_up(embed_dim, 128)
    if n_pad != embed_dim:
        w_kn = jnp.pad(w_kn, ((0, 0), (0, n_pad - embed_dim)))
    return w_kn.astype(compute_dtype)


def patch_embedding_forward(x, w_kn, patch_size, embed_dim):
    """x: (B, C, D, H, W) NCDHW, w_kn: (C*p^3, Np) bf16 -> (B, L, embed_dim)."""
    p = patch_size
    B, C, D, H, W = x.shape
    assert D % p == 0 and H % p == 0 and W % p == 0
    gd, gh, gw = D // p, H // p, W // p
    L = gd * gh * gw
    # Conv3d with kernel == stride and no bias  ==  im2col unfold + GEMM.
    # Unfold runs in bf16 so the one unavoidable HBM read+write is half size.
    # TODO(synk): fuse the unfold into the pallas_call A operand once Mosaic
    # can lower the required lane-splitting relayout (allow_input_fusion /
    # in-kernel strided-DMA gather).
    patches = x.astype(jnp.bfloat16).reshape(B, C, gd, p, gh, p, gw, p)
    patches = patches.transpose(0, 2, 4, 6, 1, 3, 5, 7).reshape(B * L, C * p ** 3)
    out = pallas_patch_matmul(patches, w_kn, out_dtype=jnp.float32)
    if out.shape[1] != embed_dim:
        out = out[:, :embed_dim]
    return out.reshape(B, L, embed_dim)


# ------------------------------ reference ------------------------------

def patch_embedding_reference(x, w_oidhw, patch_size):
    """Pure-JAX reference: actual strided 3-D convolution, HIGHEST precision."""
    p = patch_size
    y = jax.lax.conv_general_dilated(
        x, w_oidhw, window_strides=(p, p, p), padding="VALID",
        dimension_numbers=("NCDHW", "OIDHW", "NCDHW"),
        precision=jax.lax.Precision.HIGHEST)
    B, N = y.shape[0], y.shape[1]
    return y.reshape(B, N, -1).transpose(0, 2, 1)   # flatten(2) + 'bcs->bsc'


# -------------------------------- main ---------------------------------

if __name__ == "__main__":
    B, C, img, p, embed_dim = 2, 2, 32, 8, 512   # small but exercises M & N tiling

    key = jax.random.PRNGKey(0)
    kx, kw = jax.random.split(key)
    x = jax.random.normal(kx, (B, C, img, img, img), dtype=jnp.float32)
    w = 0.02 * jax.random.normal(kw, (embed_dim, C, p, p, p), dtype=jnp.float32)

    w_kn = prepare_patch_weight(w)                 # done once, not per forward
    fwd = jax.jit(functools.partial(patch_embedding_forward,
                                    patch_size=p, embed_dim=embed_dim))
    out = fwd(x, w_kn)
    jax.block_until_ready(out)

    L = (img // p) ** 3
    assert out.shape == (B, L, embed_dim), out.shape

    ref = patch_embedding_reference(x, w, p)
    err = float(jnp.max(jnp.abs(out - ref)))
    assert err < 5e-2, f"Pallas vs conv3d reference mismatch: max abs err {err}"
    print("KERNEL_OK")
</pallas_src>

<mosaic_0001>
module attributes {stable_mosaic.version = 11 : i64} {
  func.func @_resident_matmul_kernel(%arg0: i32, %arg1: i32, %arg2: memref<64x1024xbf16, #tpu.memory_space<vmem>>, %arg3: memref<1024x512xbf16, #tpu.memory_space<vmem>>, %arg4: memref<64x512xf32, #tpu.memory_space<vmem>>) attributes {dimension_semantics = [#tpu.dimension_semantics<parallel>, #tpu.dimension_semantics<parallel>], iteration_bounds = array<i64: 2, 1>, scalar_prefetch = 0 : i64, scratch_operands = 0 : i64, tpu.core_type = #tpu.core_type<tc>, window_params = [{transform_indices = @transform_0, window_bounds = array<i64: 64, 1024>}, {transform_indices = @transform_1, window_bounds = array<i64: 1024, 512>}, {transform_indices = @transform_2, window_bounds = array<i64: 64, 512>}]} {
    %c0 = arith.constant 0 : index
    %c0_0 = arith.constant 0 : index
    %0 = vector.load %arg2[%c0, %c0_0] : memref<64x1024xbf16, #tpu.memory_space<vmem>>, vector<64x1024xbf16>
    %c0_1 = arith.constant 0 : index
    %c0_2 = arith.constant 0 : index
    %1 = vector.load %arg3[%c0_1, %c0_2] : memref<1024x512xbf16, #tpu.memory_space<vmem>>, vector<1024x512xbf16>
    %cst = arith.constant dense<0.000000e+00> : vector<64x512xf32>
    %2 = tpu.matmul %0, %1, %cst {dimension_numbers = #tpu.dot_dimension_numbers<[1], [0], [0], [1], [0, 0, 1, 1], [], []>} : vector<64x1024xbf16>, vector<1024x512xbf16>, vector<64x512xf32> -> vector<64x512xf32>
    %c0_3 = arith.constant 0 : index
    %c0_4 = arith.constant 0 : index
    %3 = vector.load %arg4[%c0_3, %c0_4] : memref<64x512xf32, #tpu.memory_space<vmem>>, vector<64x512xf32>
    tpu.vector_store %arg4[%c0_3, %c0_4], %2 {strides = array<i32>} : memref<64x512xf32, #tpu.memory_space<vmem>>, vector<64x512xf32>,
    return
  }
  func.func @transform_0(%arg0: i32, %arg1: i32) -> (i32, i32) {
    %c0_i32 = arith.constant 0 : i32
    %c0_i32_0 = arith.constant 0 : i32
    return %arg0, %c0_i32 : i32, i32
  }
  func.func @transform_1(%arg0: i32, %arg1: i32) -> (i32, i32) {
    %c0_i32 = arith.constant 0 : i32
    %c0_i32_0 = arith.constant 0 : i32
    return %c0_i32, %arg1 : i32, i32
  }
  func.func @transform_2(%arg0: i32, %arg1: i32) -> (i32, i32) {
    %c0_i32 = arith.constant 0 : i32
    return %arg0, %arg1 : i32, i32
  }
}

</mosaic_0001>

<llo_original>
// kernel: patch_embedding_forward.1
$region0: #{patch_embedding_forward.1}
  #allocation0 [shape = 'u32[]', space=smem, size = 0x4, offset = 0x4, fixed_abs, tag = 'smem constant byte address 0x4 - core index']
  #allocation1 [shape = 'u32[144,128]{1,0:T(1,128)}', space=vmem, size = 0x12000, scoped, tag = 'internal scratch']
  %s0 = inlined_call_operand.vmem [shape: bf16[128,1024], index: 0, kind: input, shape index: {}]
  %s1 = inlined_call_operand.vmem [shape: bf16[1024,512], index: 1, kind: input, shape index: {}]
  %s2 = inlined_call_operand.hbm [shape: f32[128,512], index: 2, kind: output, shape index: {}]
  %s3 = sld [smem:[#allocation0]]
  $region41: #{patch_embedding_forward.1} parent=0
    _
  %s5 = ssub.s32 1, %s3
  %s6 = scalar_select 0, %s5, %s3
  $region1: #{patch_embedding_forward.1} parent=0
    #allocation2 [shape = 'u8[262144]{0}', space=vmem, size = 0x40000, scoped, tag = 'output window, operand 0']
    #allocation3 [shape = 's32[2]{0}', space=sflag, size = 0x8, scoped, tag = 'scoped memory for patch_embedding_forward.1']
    %7 = vsyncpa [#allocation3], 0
    %s8 = scalar_lea.sflag [#allocation3], 1
    %9 = vsyncpa %s8, 0
    loop: start=0, step=1, limit=4
    $region2: #{patch_embedding_forward.1} parent=1 // loop_pre_header
      _
    $region3: #{patch_embedding_forward.1} parent=1 // loop_header
      %s11 = sphi 0, %s15
      %p12 = scmp.ge.s32.totalorder %s11, 4
      %s18 = sphi 0, %s30
      %s19 = sphi 0, %s26
      %s20 = sphi 0, %s18
      %s21 = sphi 0, %s19
      %s22 = sphi 0, %s20
      %s23 = sphi 0, %s21
      %s33 = sphi 0, %s35
      %s36 = sphi 0, %s33
      %s37 = sphi 0, %s36
      %s53 = sphi 0, %s37
      %s59 = sphi 0, %s61
      %s62 = sphi 0, %s59
      %s63 = sphi 0, %s62
      %s79 = sphi 0, %s63
      %s87 = sphi 0, %s89
      %s90 = sphi 0, %s87
      %s91 = sphi 0, %s90
      %s107 = sphi 0, %s91
    $region4: #{patch_embedding_forward.1} parent=1 // loop_header_branch
      %14 = sbr.rel (%p12) target = $region8
    $region5: #{patch_embedding_forward.1} parent=1 // loop_body
      %s16 = ssub.s32 %s11, 1
      %s17 = ssub.s32 %s11, 2
      %s24 = sadd.s32 1, %s19
      %p25 = scmp.ge.s32.totalorder %s24, 1
      %s26 = scalar_select %p25, 0, %s24
      %s27 = sadd.s32 1, %s18
      %s28 = scalar_select %p25, %s27, %s18
      %p29 = scmp.ge.s32.totalorder %s28, 2
      %s30 = scalar_select %p29, 0, %s28
      %s31 = ssub.s32 %s18, %s30
      %p32 = scmp.eq.s32.totalorder %s31, 0
      %s34 = sadd.s32 %s33, 1
      %s35 = scalar_select %p32, %s33, %s34
      %p38 = pneg %p32
      %p39 = scmp.eq.s32.totalorder %s11, 1
      %p40 = por %p38, %p39
      %p41 = scmp.ne.s32.totalorder %s33, %s36
      %p42 = scmp.eq.s32.totalorder %s11, 0
      %p43 = por %p41, %p42
      %p44 = scmp.ne.s32.totalorder %s33, %s36
      %p45 = scmp.eq.s32.totalorder %s16, 1
      %p46 = por %p44, %p45
      %p47 = scmp.ne.s32.totalorder %s36, %s37
      %p48 = scmp.eq.s32.totalorder %s16, 0
      %p49 = por %p47, %p48
      %p50 = scmp.ne.s32.totalorder %s36, %s37
      %p51 = scmp.eq.s32.totalorder %s17, 1
      %p52 = por %p50, %p51
      %p54 = scmp.ne.s32.totalorder %s37, %s53
      %p55 = scmp.eq.s32.totalorder %s17, 0
      %p56 = por %p54, %p55
      %s57 = ssub.s32 %s19, %s26
      %p58 = scmp.eq.s32.totalorder %s57, 0
      %s60 = sadd.s32 %s59, 1
      %s61 = scalar_select %p58, %s59, %s60
      %p64 = pneg %p58
      %p65 = scmp.eq.s32.totalorder %s11, 1
      %p66 = por %p64, %p65
      %p67 = scmp.ne.s32.totalorder %s59, %s62
      %p68 = scmp.eq.s32.totalorder %s11, 0
      %p69 = por %p67, %p68
      %p70 = scmp.ne.s32.totalorder %s59, %s62
      %p71 = scmp.eq.s32.totalorder %s16, 1
      %p72 = por %p70, %p71
      %p73 = scmp.ne.s32.totalorder %s62, %s63
      %p74 = scmp.eq.s32.totalorder %s16, 0
      %p75 = por %p73, %p74
      %p76 = scmp.ne.s32.totalorder %s62, %s63
      %p77 = scmp.eq.s32.totalorder %s17, 1
      %p78 = por %p76, %p77
      %p80 = scmp.ne.s32.totalorder %s63, %s79
      %p81 = scmp.eq.s32.totalorder %s17, 0
      %p82 = por %p80, %p81
      %s83 = ssub.s32 %s18, %s30
      %s84 = ssub.s32 %s19, %s26
      %s85 = sor.u32 %s83, %s84
      %p86 = scmp.eq.s32.totalorder %s85, 0
      %s88 = sadd.s32 %s87, 1
      %s89 = scalar_select %p86, %s87, %s88
      %p92 = pneg %p86
      %p93 = scmp.eq.s32.totalorder %s11, 1
      %p94 = por %p92, %p93
      %p95 = scmp.ne.s32.totalorder %s87, %s90
      %p96 = scmp.eq.s32.totalorder %s11, 0
      %p97 = por %p95, %p96
      %p98 = scmp.ne.s32.totalorder %s87, %s90
      %p99 = scmp.eq.s32.totalorder %s16, 1
      %p100 = por %p98, %p99
      %p101 = scmp.ne.s32.totalorder %s90, %s91
      %p102 = scmp.eq.s32.totalorder %s16, 0
      %p103 = por %p101, %p102
      %p104 = scmp.ne.s32.totalorder %s90, %s91
      %p105 = scmp.eq.s32.totalorder %s17, 1
      %p106 = por %p104, %p105
      %p108 = scmp.ne.s32.totalorder %s91, %s107
      %p109 = scmp.eq.s32.totalorder %s17, 0
      %p110 = por %p108, %p109
      %p111 = scmp.le.s32.totalorder 1, %s11
      %p112 = scmp.lt.s32.totalorder %s11, 3
      %p113 = pnand %p111, %p112
      %p114 = pneg %p113
      // Predicated region
      $region9: #{patch_embedding_forward.1} parent=5 // pred_check
        _
      $region10: #{patch_embedding_forward.1} parent=5 // pred_check_branch
        %116 = sbr.rel (%p113) target = $region12
      $region11: #{patch_embedding_forward.1} parent=5 // pred_region
        %s117 = ssub.s32 %s11, 1
        // Predicated region
        $region13: #{patch_embedding_forward.1} parent=11 // pred_check
          %p118 = pneg %p75
        $region14: #{patch_embedding_forward.1} parent=11 // pred_check_branch
          %120 = sbr.rel (%p118) target = $region16
        $region15: #{patch_embedding_forward.1} parent=11 // pred_region
          %s121 = smul.u32 4, %s21
          %p122 = scmp.lt.s32.totalorder %s121, 3
          %s123 = scalar_select %p122, %s121, 3
          %s124 = smul.addr %s123, 4
          %s125 = scalar_lea.vmem %s1, %s124
          %s126 = smul.u32 4, %s21
        $region16: #{patch_embedding_forward.1} parent=11 // pred_fallthru
          _
      $region12: #{patch_embedding_forward.1} parent=5 // pred_fallthru
        _
      %p127 = scmp.lt.s32.totalorder %s11, 2
      // Predicated region
      $region17: #{patch_embedding_forward.1} parent=5 // pred_check
        %p128 = pneg %p127
      $region18: #{patch_embedding_forward.1} parent=5 // pred_check_branch
        %130 = sbr.rel (%p128) target = $region20
      $region19: #{patch_embedding_forward.1} parent=5 // pred_region
        // Predicated region
        $region21: #{patch_embedding_forward.1} parent=19 // pred_check
          %p131 = pneg %p43
        $region22: #{patch_embedding_forward.1} parent=19 // pred_check_branch
          %133 = sbr.rel (%p131) target = $region24
        $region23: #{patch_embedding_forward.1} parent=19 // pred_region
          %s134 = smul.u32 8, %s18
          %p135 = scmp.lt.s32.totalorder %s134, 15
          %s136 = scalar_select %p135, %s134, 15
          %s137 = smul.addr %s136, 8
          %s138 = smul.addr %s137, 4
          %s139 = scalar_lea.vmem %s0, %s138
          %s140 = smul.u32 8, %s18
        $region24: #{patch_embedding_forward.1} parent=19 // pred_fallthru
          _
      $region20: #{patch_embedding_forward.1} parent=5 // pred_fallthru
        _
      %p141 = scmp.le.s32.totalorder 1, %s11
      %p142 = scmp.lt.s32.totalorder %s11, 3
      %p143 = pnand %p141, %p142
      %p144 = pneg %p143
      // Predicated region
      $region25: #{patch_embedding_forward.1} parent=5 // pred_check
        _
      $region26: #{patch_embedding_forward.1} parent=5 // pred_check_branch
        %146 = sbr.rel (%p143) target = $region28
      $region27: #{patch_embedding_forward.1} parent=5 // pred_region
        %s147 = ssub.s32 %s11, 1
        %s148 = smul.u32 8, %s20
        %p149 = scmp.lt.s32.totalorder %s148, 15
        %s150 = scalar_select %p149, %s148, 15
        %s151 = smul.addr %s150, 8
        %s152 = smul.addr %s151, 4
        %s153 = scalar_lea.vmem %s0, %s152
        %p154 = pneg %p49
        %p155 = pneg %p46
        %s156 = smul.u32 4, %s21
        %p157 = scmp.lt.s32.totalorder %s156, 3
        %s158 = scalar_select %p157, %s156, 3
        %s159 = smul.addr %s158, 4
        %s160 = scalar_lea.vmem %s1, %s159
        %p161 = pneg %p75
        %p162 = pneg %p72
        %p163 = pneg %p103
        %p164 = pneg %p100
        %s165 = sand.u32 %s90, 1
        %s166 = scalar_lea.sflag [#allocation3], %s165
        %s167 = sand.u32 %s90, 1
        %s168 = smul.addr %s167, 256
        %s169 = scalar_lea.vmem [#allocation2], %s168
        %s170 = smul.u32 8, %s20
        %p171 = scmp.lt.s32.totalorder %s170, 15
        %s172 = scalar_select %p171, %s170, 15
        %s173 = smul.addr %s172, 8
        %s174 = smul.addr %s173, 4
        %s175 = scalar_lea.vmem %s0, %s174
        %s176 = smul.u32 8, %s20
        %s177 = smul.u32 4, %s21
        %p178 = scmp.lt.s32.totalorder %s177, 3
        %s179 = scalar_select %p178, %s177, 3
        %s180 = smul.addr %s179, 4
        %s181 = scalar_lea.vmem %s1, %s180
        %s182 = smul.u32 4, %s21
        %s183 = smul.u32 8, %s20
        %s184 = smul.u32 4, %s21
        %v185 = vld [vmem:[%s175] sm:$0xff]
        %v186 = vld [vmem:[%s175 + $0x8] sm:$0xff]
        %v187 = vld [vmem:[%s175 + $0x10] sm:$0xff]
        %v188 = vld [vmem:[%s175 + $0x18] sm:$0xff]
        %v189 = vld [vmem:[%s175 + $0x20] sm:$0xff]
        %v190 = vld [vmem:[%s175 + $0x28] sm:$0xff]
        %v191 = vld [vmem:[%s175 + $0x30] sm:$0xff]
        %v192 = vld [vmem:[%s175 + $0x38] sm:$0xff]
        %v193 = vld [vmem:[%s175 + $0x40] sm:$0xff]
        %v194 = vld [vmem:[%s175 + $0x48] sm:$0xff]
        %v195 = vld [vmem:[%s175 + $0x50] sm:$0xff]
        %v196 = vld [vmem:[%s175 + $0x58] sm:$0xff]
        %v197 = vld [vmem:[%s175 + $0x60] sm:$0xff]
        %v198 = vld [vmem:[%s175 + $0x68] sm:$0xff]
        %v199 = vld [vmem:[%s175 + $0x70] sm:$0xff]
        %v200 = vld [vmem:[%s175 + $0x78] sm:$0xff]
        %v201 = vld [vmem:[%s175 + $0x80] sm:$0xff]
        %v202 = vld [vmem:[%s175 + $0x88] sm:$0xff]
        %v203 = vld [vmem:[%s175 + $0x90] sm:$0xff]
        %v204 = vld [vmem:[%s175 + $0x98] sm:$0xff]
        %v205 = vld [vmem:[%s175 + $0xa0] sm:$0xff]
        %v206 = vld [vmem:[%s175 + $0xa8] sm:$0xff]
        %v207 = vld [vmem:[%s175 + $0xb0] sm:$0xff]
        %v208 = vld [vmem:[%s175 + $0xb8] sm:$0xff]
        %v209 = vld [vmem:[%s175 + $0xc0] sm:$0xff]
        %v210 = vld [vmem:[%s175 + $0xc8] sm:$0xff]
        %v211 = vld [vmem:[%s175 + $0xd0] sm:$0xff]
        %v212 = vld [vmem:[%s175 + $0xd8] sm:$0xff]
        %v213 = vld [vmem:[%s175 + $0xe0] sm:$0xff]
        %v214 = vld [vmem:[%s175 + $0xe8] sm:$0xff]
        %v215 = vld [vmem:[%s175 + $0xf0] sm:$0xff]
        %v216 = vld [vmem:[%s175 + $0xf8] sm:$0xff]
        %v217 = vld [vmem:[%s181] sm:$0xff]
        %v218 = vld [vmem:[%s181 + $0x8] sm:$0xff]
        %v219 = vld [vmem:[%s181 + $0x10] sm:$0xff]
        %v220 = vld [vmem:[%s181 + $0x18] sm:$0xff]
        %v221 = vld [vmem:[%s181 + $0x20] sm:$0xff]
        %v222 = vld [vmem:[%s181 + $0x28] sm:$0xff]
        %v223 = vld [vmem:[%s181 + $0x30] sm:$0xff]
        %v224 = vld [vmem:[%s181 + $0x38] sm:$0xff]
        %v225 = vld [vmem:[%s181 + $0x40] sm:$0xff]
        %v226 = vld [vmem:[%s181 + $0x48] sm:$0xff]
        %v227 = vld [vmem:[%s181 + $0x50] sm:$0xff]
        %v228 = vld [vmem:[%s181 + $0x58] sm:$0xff]
        %v229 = vld [vmem:[%s181 + $0x60] sm:$0xff]
        %v230 = vld [vmem:[%s181 + $0x68] sm:$0xff]
        %v231 = vld [vmem:[%s181 + $0x70] sm:$0xff]
        %v232 = vld [vmem:[%s181 + $0x78] sm:$0xff]
        %v233 = vld [vmem:[%s181 + $0x80] sm:$0xff]
        %v234 = vld [vmem:[%s181 + $0x88] sm:$0xff]
        %v235 = vld [vmem:[%s181 + $0x90] sm:$0xff]
        %v236 = vld [vmem:[%s181 + $0x98] sm:$0xff]
        %v237 = vld [vmem:[%s181 + $0xa0] sm:$0xff]
        %v238 = vld [vmem:[%s181 + $0xa8] sm:$0xff]
        %v239 = vld [vmem:[%s181 + $0xb0] sm:$0xff]
        %v240 = vld [vmem:[%s181 + $0xb8] sm:$0xff]
        %v241 = vld [vmem:[%s181 + $0xc0] sm:$0xff]
        %v242 = vld [vmem:[%s181 + $0xc8] sm:$0xff]
        %v243 = vld [vmem:[%s181 + $0xd0] sm:$0xff]
        %v244 = vld [vmem:[%s181 + $0xd8] sm:$0xff]
        %v245 = vld [vmem:[%s181 + $0xe0] sm:$0xff]
        %v246 = vld [vmem:[%s181 + $0xe8] sm:$0xff]
        %v247 = vld [vmem:[%s181 + $0xf0] sm:$0xff]
        %v248 = vld [vmem:[%s181 + $0xf8] sm:$0xff]
        %v249 = vld [vmem:[%s181 + $0x100] sm:$0xff]
        %v250 = vld [vmem:[%s181 + $0x108] sm:$0xff]
        %v251 = vld [vmem:[%s181 + $0x110] sm:$0xff]
        %v252 = vld [vmem:[%s181 + $0x118] sm:$0xff]
        %v253 = vld [vmem:[%s181 + $0x120] sm:$0xff]
        %v254 = vld [vmem:[%s181 + $0x128] sm:$0xff]
        %v255 = vld [vmem:[%s181 + $0x130] sm:$0xff]
        %v256 = vld [vmem:[%s181 + $0x138] sm:$0xff]
        %v257 = vld [vmem:[%s181 + $0x140] sm:$0xff]
        %v258 = vld [vmem:[%s181 + $0x148] sm:$0xff]
        %v259 = vld [vmem:[%s181 + $0x150] sm:$0xff]
        %v260 = vld [vmem:[%s181 + $0x158] sm:$0xff]
        %v261 = vld [vmem:[%s181 + $0x160] sm:$0xff]
        %v262 = vld [vmem:[%s181 + $0x168] sm:$0xff]
        %v263 = vld [vmem:[%s181 + $0x170] sm:$0xff]
        %v264 = vld [vmem:[%s181 + $0x178] sm:$0xff]
        %v265 = vld [vmem:[%s181 + $0x180] sm:$0xff]
        %v266 = vld [vmem:[%s181 + $0x188] sm:$0xff]
        %v267 = vld [vmem:[%s181 + $0x190] sm:$0xff]
        %v268 = vld [vmem:[%s181 + $0x198] sm:$0xff]
        %v269 = vld [vmem:[%s181 + $0x1a0] sm:$0xff]
        %v270 = vld [vmem:[%s181 + $0x1a8] sm:$0xff]
        %v271 = vld [vmem:[%s181 + $0x1b0] sm:$0xff]
        %v272 = vld [vmem:[%s181 + $0x1b8] sm:$0xff]
        %v273 = vld [vmem:[%s181 + $0x1c0] sm:$0xff]
        %v274 = vld [vmem:[%s181 + $0x1c8] sm:$0xff]
        %v275 = vld [vmem:[%s181 + $0x1d0] sm:$0xff]
        %v276 = vld [vmem:[%s181 + $0x1d8] sm:$0xff]
        %v277 = vld [vmem:[%s181 + $0x1e0] sm:$0xff]
        %v278 = vld [vmem:[%s181 + $0x1e8] sm:$0xff]
        %v279 = vld [vmem:[%s181 + $0x1f0] sm:$0xff]
        %v280 = vld [vmem:[%s181 + $0x1f8] sm:$0xff]
        %v281 = vld [vmem:[%s181 + $0x200] sm:$0xff]
        %v282 = vld [vmem:[%s181 + $0x208] sm:$0xff]
        %v283 = vld [vmem:[%s181 + $0x210] sm:$0xff]
        %v284 = vld [vmem:[%s181 + $0x218] sm:$0xff]
        %v285 = vld [vmem:[%s181 + $0x220] sm:$0xff]
        %v286 = vld [vmem:[%s181 + $0x228] sm:$0xff]
        %v287 = vld [vmem:[%s181 + $0x230] sm:$0xff]
        %v288 = vld [vmem:[%s181 + $0x238] sm:$0xff]
        %v289 = vld [vmem:[%s181 + $0x240] sm:$0xff]
        %v290 = vld [vmem:[%s181 + $0x248] sm:$0xff]
        %v291 = vld [vmem:[%s181 + $0x250] sm:$0xff]
        %v292 = vld [vmem:[%s181 + $0x258] sm:$0xff]
        %v293 = vld [vmem:[%s181 + $0x260] sm:$0xff]
        %v294 = vld [vmem:[%s181 + $0x268] sm:$0xff]
        %v295 = vld [vmem:[%s181 + $0x270] sm:$0xff]
        %v296 = vld [vmem:[%s181 + $0x278] sm:$0xff]
        %v297 = vld [vmem:[%s181 + $0x280] sm:$0xff]
        %v298 = vld [vmem:[%s181 + $0x288] sm:$0xff]
        %v299 = vld [vmem:[%s181 + $0x290] sm:$0xff]
        %v300 = vld [vmem:[%s181 + $0x298] sm:$0xff]
        %v301 = vld [vmem:[%s181 + $0x2a0] sm:$0xff]
        %v302 = vld [vmem:[%s181 + $0x2a8] sm:$0xff]
        %v303 = vld [vmem:[%s181 + $0x2b0] sm:$0xff]
        %v304 = vld [vmem:[%s181 + $0x2b8] sm:$0xff]
        %v305 = vld [vmem:[%s181 + $0x2c0] sm:$0xff]
        %v306 = vld [vmem:[%s181 + $0x2c8] sm:$0xff]
        %v307 = vld [vmem:[%s181 + $0x2d0] sm:$0xff]
        %v308 = vld [vmem:[%s181 + $0x2d8] sm:$0xff]
        %v309 = vld [vmem:[%s181 + $0x2e0] sm:$0xff]
        %v310 = vld [vmem:[%s181 + $0x2e8] sm:$0xff]
        %v311 = vld [vmem:[%s181 + $0x2f0] sm:$0xff]
        %v312 = vld [vmem:[%s181 + $0x2f8] sm:$0xff]
        %v313 = vld [vmem:[%s181 + $0x300] sm:$0xff]
        %v314 = vld [vmem:[%s181 + $0x308] sm:$0xff]
        %v315 = vld [vmem:[%s181 + $0x310] sm:$0xff]
        %v316 = vld [vmem:[%s181 + $0x318] sm:$0xff]
        %v317 = vld [vmem:[%s181 + $0x320] sm:$0xff]
        %v318 = vld [vmem:[%s181 + $0x328] sm:$0xff]
        %v319 = vld [vmem:[%s181 + $0x330] sm:$0xff]
        %v320 = vld [vmem:[%s181 + $0x338] sm:$0xff]
        %v321 = vld [vmem:[%s181 + $0x340] sm:$0xff]
        %v322 = vld [vmem:[%s181 + $0x348] sm:$0xff]
        %v323 = vld [vmem:[%s181 + $0x350] sm:$0xff]
        %v324 = vld [vmem:[%s181 + $0x358] sm:$0xff]
        %v325 = vld [vmem:[%s181 + $0x360] sm:$0xff]
        %v326 = vld [vmem:[%s181 + $0x368] sm:$0xff]
        %v327 = vld [vmem:[%s181 + $0x370] sm:$0xff]
        %v328 = vld [vmem:[%s181 + $0x378] sm:$0xff]
        %v329 = vld [vmem:[%s181 + $0x380] sm:$0xff]
        %v330 = vld [vmem:[%s181 + $0x388] sm:$0xff]
        %v331 = vld [vmem:[%s181 + $0x390] sm:$0xff]
        %v332 = vld [vmem:[%s181 + $0x398] sm:$0xff]
        %v333 = vld [vmem:[%s181 + $0x3a0] sm:$0xff]
        %v334 = vld [vmem:[%s181 + $0x3a8] sm:$0xff]
        %v335 = vld [vmem:[%s181 + $0x3b0] sm:$0xff]
        %v336 = vld [vmem:[%s181 + $0x3b8] sm:$0xff]
        %v337 = vld [vmem:[%s181 + $0x3c0] sm:$0xff]
        %v338 = vld [vmem:[%s181 + $0x3c8] sm:$0xff]
        %v339 = vld [vmem:[%s181 + $0x3d0] sm:$0xff]
        %v340 = vld [vmem:[%s181 + $0x3d8] sm:$0xff]
        %v341 = vld [vmem:[%s181 + $0x3e0] sm:$0xff]
        %v342 = vld [vmem:[%s181 + $0x3e8] sm:$0xff]
        %v343 = vld [vmem:[%s181 + $0x3f0] sm:$0xff]
        %v344 = vld [vmem:[%s181 + $0x3f8] sm:$0xff]
        %v345 = vld [vmem:[%s181 + $0x400] sm:$0xff]
        %v346 = vld [vmem:[%s181 + $0x408] sm:$0xff]
        %v347 = vld [vmem:[%s181 + $0x410] sm:$0xff]
        %v348 = vld [vmem:[%s181 + $0x418] sm:$0xff]
        %v349 = vld [vmem:[%s181 + $0x420] sm:$0xff]
        %v350 = vld [vmem:[%s181 + $0x428] sm:$0xff]
        %v351 = vld [vmem:[%s181 + $0x430] sm:$0xff]
        %v352 = vld [vmem:[%s181 + $0x438] sm:$0xff]
        %v353 = vld [vmem:[%s181 + $0x440] sm:$0xff]
        %v354 = vld [vmem:[%s181 + $0x448] sm:$0xff]
        %v355 = vld [vmem:[%s181 + $0x450] sm:$0xff]
        %v356 = vld [vmem:[%s181 + $0x458] sm:$0xff]
        %v357 = vld [vmem:[%s181 + $0x460] sm:$0xff]
        %v358 = vld [vmem:[%s181 + $0x468] sm:$0xff]
        %v359 = vld [vmem:[%s181 + $0x470] sm:$0xff]
        %v360 = vld [vmem:[%s181 + $0x478] sm:$0xff]
        %v361 = vld [vmem:[%s181 + $0x480] sm:$0xff]
        %v362 = vld [vmem:[%s181 + $0x488] sm:$0xff]
        %v363 = vld [vmem:[%s181 + $0x490] sm:$0xff]
        %v364 = vld [vmem:[%s181 + $0x498] sm:$0xff]
        %v365 = vld [vmem:[%s181 + $0x4a0] sm:$0xff]
        %v366 = vld [vmem:[%s181 + $0x4a8] sm:$0xff]
        %v367 = vld [vmem:[%s181 + $0x4b0] sm:$0xff]
        %v368 = vld [vmem:[%s181 + $0x4b8] sm:$0xff]
        %v369 = vld [vmem:[%s181 + $0x4c0] sm:$0xff]
        %v370 = vld [vmem:[%s181 + $0x4c8] sm:$0xff]
        %v371 = vld [vmem:[%s181 + $0x4d0] sm:$0xff]
        %v372 = vld [vmem:[%s181 + $0x4d8] sm:$0xff]
        %v373 = vld [vmem:[%s181 + $0x4e0] sm:$0xff]
        %v374 = vld [vmem:[%s181 + $0x4e8] sm:$0xff]
        %v375 = vld [vmem:[%s181 + $0x4f0] sm:$0xff]
        %v376 = vld [vmem:[%s181 + $0x4f8] sm:$0xff]
        %v377 = vld [vmem:[%s181 + $0x500] sm:$0xff]
        %v378 = vld [vmem:[%s181 + $0x508] sm:$0xff]
        %v379 = vld [vmem:[%s181 + $0x510] sm:$0xff]
        %v380 = vld [vmem:[%s181 + $0x518] sm:$0xff]
        %v381 = vld [vmem:[%s181 + $0x520] sm:$0xff]
        %v382 = vld [vmem:[%s181 + $0x528] sm:$0xff]
        %v383 = vld [vmem:[%s181 + $0x530] sm:$0xff]
        %v384 = vld [vmem:[%s181 + $0x538] sm:$0xff]
        %v385 = vld [vmem:[%s181 + $0x540] sm:$0xff]
        %v386 = vld [vmem:[%s181 + $0x548] sm:$0xff]
        %v387 = vld [vmem:[%s181 + $0x550] sm:$0xff]
        %v388 = vld [vmem:[%s181 + $0x558] sm:$0xff]
        %v389 = vld [vmem:[%s181 + $0x560] sm:$0xff]
        %v390 = vld [vmem:[%s181 + $0x568] sm:$0xff]
        %v391 = vld [vmem:[%s181 + $0x570] sm:$0xff]
        %v392 = vld [vmem:[%s181 + $0x578] sm:$0xff]
        %v393 = vld [vmem:[%s181 + $0x580] sm:$0xff]
        %v394 = vld [vmem:[%s181 + $0x588] sm:$0xff]
        %v395 = vld [vmem:[%s181 + $0x590] sm:$0xff]
        %v396 = vld [vmem:[%s181 + $0x598] sm:$0xff]
        %v397 = vld [vmem:[%s181 + $0x5a0] sm:$0xff]
        %v398 = vld [vmem:[%s181 + $0x5a8] sm:$0xff]
        %v399 = vld [vmem:[%s181 + $0x5b0] sm:$0xff]
        %v400 = vld [vmem:[%s181 + $0x5b8] sm:$0xff]
        %v401 = vld [vmem:[%s181 + $0x5c0] sm:$0xff]
        %v402 = vld [vmem:[%s181 + $0x5c8] sm:$0xff]
        %v403 = vld [vmem:[%s181 + $0x5d0] sm:$0xff]
        %v404 = vld [vmem:[%s181 + $0x5d8] sm:$0xff]
        %v405 = vld [vmem:[%s181 + $0x5e0] sm:$0xff]
        %v406 = vld [vmem:[%s181 + $0x5e8] sm:$0xff]
        %v407 = vld [vmem:[%s181 + $0x5f0] sm:$0xff]
        %v408 = vld [vmem:[%s181 + $0x5f8] sm:$0xff]
        %v409 = vld [vmem:[%s181 + $0x600] sm:$0xff]
        %v410 = vld [vmem:[%s181 + $0x608] sm:$0xff]
        %v411 = vld [vmem:[%s181 + $0x610] sm:$0xff]
        %v412 = vld [vmem:[%s181 + $0x618] sm:$0xff]
        %v413 = vld [vmem:[%s181 + $0x620] sm:$0xff]
        %v414 = vld [vmem:[%s181 + $0x628] sm:$0xff]
        %v415 = vld [vmem:[%s181 + $0x630] sm:$0xff]
        %v416 = vld [vmem:[%s181 + $0x638] sm:$0xff]
        %v417 = vld [vmem:[%s181 + $0x640] sm:$0xff]
        %v418 = vld [vmem:[%s181 + $0x648] sm:$0xff]
        %v419 = vld [vmem:[%s181 + $0x650] sm:$0xff]
        %v420 = vld [vmem:[%s181 + $0x658] sm:$0xff]
        %v421 = vld [vmem:[%s181 + $0x660] sm:$0xff]
        %v422 = vld [vmem:[%s181 + $0x668] sm:$0xff]
        %v423 = vld [vmem:[%s181 + $0x670] sm:$0xff]
        %v424 = vld [vmem:[%s181 + $0x678] sm:$0xff]
        %v425 = vld [vmem:[%s181 + $0x680] sm:$0xff]
        %v426 = vld [vmem:[%s181 + $0x688] sm:$0xff]
        %v427 = vld [vmem:[%s181 + $0x690] sm:$0xff]
        %v428 = vld [vmem:[%s181 + $0x698] sm:$0xff]
        %v429 = vld [vmem:[%s181 + $0x6a0] sm:$0xff]
        %v430 = vld [vmem:[%s181 + $0x6a8] sm:$0xff]
        %v431 = vld [vmem:[%s181 + $0x6b0] sm:$0xff]
        %v432 = vld [vmem:[%s181 + $0x6b8] sm:$0xff]
        %v433 = vld [vmem:[%s181 + $0x6c0] sm:$0xff]
        %v434 = vld [vmem:[%s181 + $0x6c8] sm:$0xff]
        %v435 = vld [vmem:[%s181 + $0x6d0] sm:$0xff]
        %v436 = vld [vmem:[%s181 + $0x6d8] sm:$0xff]
        %v437 = vld [vmem:[%s181 + $0x6e0] sm:$0xff]
        %v438 = vld [vmem:[%s181 + $0x6e8] sm:$0xff]
        %v439 = vld [vmem:[%s181 + $0x6f0] sm:$0xff]
        %v440 = vld [vmem:[%s181 + $0x6f8] sm:$0xff]
        %v441 = vld [vmem:[%s181 + $0x700] sm:$0xff]
        %v442 = vld [vmem:[%s181 + $0x708] sm:$0xff]
        %v443 = vld [vmem:[%s181 + $0x710] sm:$0xff]
        %v444 = vld [vmem:[%s181 + $0x718] sm:$0xff]
        %v445 = vld [vmem:[%s181 + $0x720] sm:$0xff]
        %v446 = vld [vmem:[%s181 + $0x728] sm:$0xff]
        %v447 = vld [vmem:[%s181 + $0x730] sm:$0xff]
        %v448 = vld [vmem:[%s181 + $0x738] sm:$0xff]
        %v449 = vld [vmem:[%s181 + $0x740] sm:$0xff]
        %v450 = vld [vmem:[%s181 + $0x748] sm:$0xff]
        %v451 = vld [vmem:[%s181 + $0x750] sm:$0xff]
        %v452 = vld [vmem:[%s181 + $0x758] sm:$0xff]
        %v453 = vld [vmem:[%s181 + $0x760] sm:$0xff]
        %v454 = vld [vmem:[%s181 + $0x768] sm:$0xff]
        %v455 = vld [vmem:[%s181 + $0x770] sm:$0xff]
        %v456 = vld [vmem:[%s181 + $0x778] sm:$0xff]
        %v457 = vld [vmem:[%s181 + $0x780] sm:$0xff]
        %v458 = vld [vmem:[%s181 + $0x788] sm:$0xff]
        %v459 = vld [vmem:[%s181 + $0x790] sm:$0xff]
        %v460 = vld [vmem:[%s181 + $0x798] sm:$0xff]
        %v461 = vld [vmem:[%s181 + $0x7a0] sm:$0xff]
        %v462 = vld [vmem:[%s181 + $0x7a8] sm:$0xff]
        %v463 = vld [vmem:[%s181 + $0x7b0] sm:$0xff]
        %v464 = vld [vmem:[%s181 + $0x7b8] sm:$0xff]
        %v465 = vld [vmem:[%s181 + $0x7c0] sm:$0xff]
        %v466 = vld [vmem:[%s181 + $0x7c8] sm:$0xff]
        %v467 = vld [vmem:[%s181 + $0x7d0] sm:$0xff]
        %v468 = vld [vmem:[%s181 + $0x7d8] sm:$0xff]
        %v469 = vld [vmem:[%s181 + $0x7e0] sm:$0xff]
        %v470 = vld [vmem:[%s181 + $0x7e8] sm:$0xff]
        %v471 = vld [vmem:[%s181 + $0x7f0] sm:$0xff]
        %v472 = vld [vmem:[%s181 + $0x7f8] sm:$0xff]
        %v505 = vunpack.c.l.b16 %v185
        %v506 = vunpack.c.h.b16 %v185
        %v507 = vunpack.c.l.b16 %v186
        %v508 = vunpack.c.h.b16 %v186
        %v509 = vunpack.c.l.b16 %v187
        %v510 = vunpack.c.h.b16 %v187
        %v511 = vunpack.c.l.b16 %v188
        %v512 = vunpack.c.h.b16 %v188
        %v513 = vunpack.c.l.b16 %v189
        %v514 = vunpack.c.h.b16 %v189
        %v515 = vunpack.c.l.b16 %v190
        %v516 = vunpack.c.h.b16 %v190
        %v517 = vunpack.c.l.b16 %v191
        %v518 = vunpack.c.h.b16 %v191
        %v519 = vunpack.c.l.b16 %v192
        %v520 = vunpack.c.h.b16 %v192
        %v521 = vunpack.c.l.b16 %v193
        %v522 = vunpack.c.h.b16 %v193
        %v523 = vunpack.c.l.b16 %v194
        %v524 = vunpack.c.h.b16 %v194
        %v525 = vunpack.c.l.b16 %v195
        %v526 = vunpack.c.h.b16 %v195
        %v527 = vunpack.c.l.b16 %v196
        %v528 = vunpack.c.h.b16 %v196
        %v529 = vunpack.c.l.b16 %v197
        %v530 = vunpack.c.h.b16 %v197
        %v531 = vunpack.c.l.b16 %v198
        %v532 = vunpack.c.h.b16 %v198
        %v533 = vunpack.c.l.b16 %v199
        %v534 = vunpack.c.h.b16 %v199
        %v535 = vunpack.c.l.b16 %v200
        %v536 = vunpack.c.h.b16 %v200
        %v537 = vunpack.c.l.b16 %v201
        %v538 = vunpack.c.h.b16 %v201
        %v539 = vunpack.c.l.b16 %v202
        %v540 = vunpack.c.h.b16 %v202
        %v541 = vunpack.c.l.b16 %v203
        %v542 = vunpack.c.h.b16 %v203
        %v543 = vunpack.c.l.b16 %v204
        %v544 = vunpack.c.h.b16 %v204
        %v545 = vunpack.c.l.b16 %v205
        %v546 = vunpack.c.h.b16 %v205
        %v547 = vunpack.c.l.b16 %v206
        %v548 = vunpack.c.h.b16 %v206
        %v549 = vunpack.c.l.b16 %v207
        %v550 = vunpack.c.h.b16 %v207
        %v551 = vunpack.c.l.b16 %v208
        %v552 = vunpack.c.h.b16 %v208
        %v553 = vunpack.c.l.b16 %v209
        %v554 = vunpack.c.h.b16 %v209
        %v555 = vunpack.c.l.b16 %v210
        %v556 = vunpack.c.h.b16 %v210
        %v557 = vunpack.c.l.b16 %v211
        %v558 = vunpack.c.h.b16 %v211
        %v559 = vunpack.c.l.b16 %v212
        %v560 = vunpack.c.h.b16 %v212
        %v561 = vunpack.c.l.b16 %v213
        %v562 = vunpack.c.h.b16 %v213
        %v563 = vunpack.c.l.b16 %v214
        %v564 = vunpack.c.h.b16 %v214
        %v565 = vunpack.c.l.b16 %v215
        %v566 = vunpack.c.h.b16 %v215
        %v567 = vunpack.c.l.b16 %v216
        %v568 = vunpack.c.h.b16 %v216
        %v569 = vpack.c.b16 %v513, %v505
        %v570 = vpack.c.b16 %v514, %v506
        %v571 = vpack.c.b16 %v515, %v507
        %v572 = vpack.c.b16 %v516, %v508
        %v573 = vpack.c.b16 %v517, %v509
        %v574 = vpack.c.b16 %v518, %v510
        %v575 = vpack.c.b16 %v519, %v511
        %v576 = vpack.c.b16 %v520, %v512
        %v577 = vpack.c.b16 %v529, %v521
        %v578 = vpack.c.b16 %v530, %v522
        %v579 = vpack.c.b16 %v531, %v523
        %v580 = vpack.c.b16 %v532, %v524
        %v581 = vpack.c.b16 %v533, %v525
        %v582 = vpack.c.b16 %v534, %v526
        %v583 = vpack.c.b16 %v535, %v527
        %v584 = vpack.c.b16 %v536, %v528
        %v585 = vpack.c.b16 %v545, %v537
        %v586 = vpack.c.b16 %v546, %v538
        %v587 = vpack.c.b16 %v547, %v539
        %v588 = vpack.c.b16 %v548, %v540
        %v589 = vpack.c.b16 %v549, %v541
        %v590 = vpack.c.b16 %v550, %v542
        %v591 = vpack.c.b16 %v551, %v543
        %v592 = vpack.c.b16 %v552, %v544
        %v593 = vpack.c.b16 %v561, %v553
        %v594 = vpack.c.b16 %v562, %v554
        %v595 = vpack.c.b16 %v563, %v555
        %v596 = vpack.c.b16 %v564, %v556
        %v597 = vpack.c.b16 %v565, %v557
        %v598 = vpack.c.b16 %v566, %v558
        %v599 = vpack.c.b16 %v567, %v559
        %v600 = vpack.c.b16 %v568, %v560
        %v889 = vunpack.c.l.b16 %v217
        %v890 = vunpack.c.h.b16 %v217
        %v891 = vunpack.c.l.b16 %v218
        %v892 = vunpack.c.h.b16 %v218
        %v893 = vunpack.c.l.b16 %v219
        %v894 = vunpack.c.h.b16 %v219
        %v895 = vunpack.c.l.b16 %v220
        %v896 = vunpack.c.h.b16 %v220
        %v897 = vunpack.c.l.b16 %v221
        %v898 = vunpack.c.h.b16 %v221
        %v899 = vunpack.c.l.b16 %v222
        %v900 = vunpack.c.h.b16 %v222
        %v901 = vunpack.c.l.b16 %v223
        %v902 = vunpack.c.h.b16 %v223
        %v903 = vunpack.c.l.b16 %v224
        %v904 = vunpack.c.h.b16 %v224
        %v905 = vunpack.c.l.b16 %v225
        %v906 = vunpack.c.h.b16 %v225
        %v907 = vunpack.c.l.b16 %v226
        %v908 = vunpack.c.h.b16 %v226
        %v909 = vunpack.c.l.b16 %v227
        %v910 = vunpack.c.h.b16 %v227
        %v911 = vunpack.c.l.b16 %v228
        %v912 = vunpack.c.h.b16 %v228
        %v913 = vunpack.c.l.b16 %v229
        %v914 = vunpack.c.h.b16 %v229
        %v915 = vunpack.c.l.b16 %v230
        %v916 = vunpack.c.h.b16 %v230
        %v917 = vunpack.c.l.b16 %v231
        %v918 = vunpack.c.h.b16 %v231
        %v919 = vunpack.c.l.b16 %v232
        %v920 = vunpack.c.h.b16 %v232
        %v921 = vunpack.c.l.b16 %v233
        %v922 = vunpack.c.h.b16 %v233
        %v923 = vunpack.c.l.b16 %v234
        %v924 = vunpack.c.h.b16 %v234
        %v925 = vunpack.c.l.b16 %v235
        %v926 = vunpack.c.h.b16 %v235
        %v927 = vunpack.c.l.b16 %v236
        %v928 = vunpack.c.h.b16 %v236
        %v929 = vunpack.c.l.b16 %v237
        %v930 = vunpack.c.h.b16 %v237
        %v931 = vunpack.c.l.b16 %v238
        %v932 = vunpack.c.h.b16 %v238
        %v933 = vunpack.c.l.b16 %v239
        %v934 = vunpack.c.h.b16 %v239
        %v935 = vunpack.c.l.b16 %v240
        %v936 = vunpack.c.h.b16 %v240
        %v937 = vunpack.c.l.b16 %v241
        %v938 = vunpack.c.h.b16 %v241
        %v939 = vunpack.c.l.b16 %v242
        %v940 = vunpack.c.h.b16 %v242
        %v941 = vunpack.c.l.b16 %v243
        %v942 = vunpack.c.h.b16 %v243
        %v943 = vunpack.c.l.b16 %v244
        %v944 = vunpack.c.h.b16 %v244
        %v945 = vunpack.c.l.b16 %v245
        %v946 = vunpack.c.h.b16 %v245
        %v947 = vunpack.c.l.b16 %v246
        %v948 = vunpack.c.h.b16 %v246
        %v949 = vunpack.c.l.b16 %v247
        %v950 = vunpack.c.h.b16 %v247
        %v951 = vunpack.c.l.b16 %v248
        %v952 = vunpack.c.h.b16 %v248
        %v953 = vunpack.c.l.b16 %v249
        %v954 = vunpack.c.h.b16 %v249
        %v955 = vunpack.c.l.b16 %v250
        %v956 = vunpack.c.h.b16 %v250
        %v957 = vunpack.c.l.b16 %v251
        %v958 = vunpack.c.h.b16 %v251
        %v959 = vunpack.c.l.b16 %v252
        %v960 = vunpack.c.h.b16 %v252
        %v961 = vunpack.c.l.b16 %v253
        %v962 = vunpack.c.h.b16 %v253
        %v963 = vunpack.c.l.b16 %v254
        %v964 = vunpack.c.h.b16 %v254
        %v965 = vunpack.c.l.b16 %v255
        %v966 = vunpack.c.h.b16 %v255
        %v967 = vunpack.c.l.b16 %v256
        %v968 = vunpack.c.h.b16 %v256
        %v969 = vunpack.c.l.b16 %v257
        %v970 = vunpack.c.h.b16 %v257
        %v971 = vunpack.c.l.b16 %v258
        %v972 = vunpack.c.h.b16 %v258
        %v973 = vunpack.c.l.b16 %v259
        %v974 = vunpack.c.h.b16 %v259
        %v975 = vunpack.c.l.b16 %v260
        %v976 = vunpack.c.h.b16 %v260
        %v977 = vunpack.c.l.b16 %v261
        %v978 = vunpack.c.h.b16 %v261
        %v979 = vunpack.c.l.b16 %v262
        %v980 = vunpack.c.h.b16 %v262
        %v981 = vunpack.c.l.b16 %v263
        %v982 = vunpack.c.h.b16 %v263
        %v983 = vunpack.c.l.b16 %v264
        %v984 = vunpack.c.h.b16 %v264
        %v985 = vunpack.c.l.b16 %v265
        %v986 = vunpack.c.h.b16 %v265
        %v987 = vunpack.c.l.b16 %v266
        %v988 = vunpack.c.h.b16 %v266
        %v989 = vunpack.c.l.b16 %v267
        %v990 = vunpack.c.h.b16 %v267
        %v991 = vunpack.c.l.b16 %v268
        %v992 = vunpack.c.h.b16 %v268
        %v993 = vunpack.c.l.b16 %v269
        %v994 = vunpack.c.h.b16 %v269
        %v995 = vunpack.c.l.b16 %v270
        %v996 = vunpack.c.h.b16 %v270
        %v997 = vunpack.c.l.b16 %v271
        %v998 = vunpack.c.h.b16 %v271
        %v999 = vunpack.c.l.b16 %v272
        %v1000 = vunpack.c.h.b16 %v272
        %v1001 = vunpack.c.l.b16 %v273
        %v1002 = vunpack.c.h.b16 %v273
        %v1003 = vunpack.c.l.b16 %v274
        %v1004 = vunpack.c.h.b16 %v274
        %v1005 = vunpack.c.l.b16 %v275
        %v1006 = vunpack.c.h.b16 %v275
        %v1007 = vunpack.c.l.b16 %v276
        %v1008 = vunpack.c.h.b16 %v276
        %v1009 = vunpack.c.l.b16 %v277
        %v1010 = vunpack.c.h.b16 %v277
        %v1011 = vunpack.c.l.b16 %v278
        %v1012 = vunpack.c.h.b16 %v278
        %v1013 = vunpack.c.l.b16 %v279
        %v1014 = vunpack.c.h.b16 %v279
        %v1015 = vunpack.c.l.b16 %v280
        %v1016 = vunpack.c.h.b16 %v280
        %v1017 = vunpack.c.l.b16 %v281
        %v1018 = vunpack.c.h.b16 %v281
        %v1019 = vunpack.c.l.b16 %v282
        %v1020 = vunpack.c.h.b16 %v282
        %v1021 = vunpack.c.l.b16 %v283
        %v1022 = vunpack.c.h.b16 %v283
        %v1023 = vunpack.c.l.b16 %v284
        %v1024 = vunpack.c.h.b16 %v284
        %v1025 = vunpack.c.l.b16 %v285
        %v1026 = vunpack.c.h.b16 %v285
        %v1027 = vunpack.c.l.b16 %v286
        %v1028 = vunpack.c.h.b16 %v286
        %v1029 = vunpack.c.l.b16 %v287
        %v1030 = vunpack.c.h.b16 %v287
        %v1031 = vunpack.c.l.b16 %v288
        %v1032 = vunpack.c.h.b16 %v288
        %v1033 = vunpack.c.l.b16 %v289
        %v1034 = vunpack.c.h.b16 %v289
        %v1035 = vunpack.c.l.b16 %v290
        %v1036 = vunpack.c.h.b16 %v290
        %v1037 = vunpack.c.l.b16 %v291
        %v1038 = vunpack.c.h.b16 %v291
        %v1039 = vunpack.c.l.b16 %v292
        %v1040 = vunpack.c.h.b16 %v292
        %v1041 = vunpack.c.l.b16 %v293
        %v1042 = vunpack.c.h.b16 %v293
        %v1043 = vunpack.c.l.b16 %v294
        %v1044 = vunpack.c.h.b16 %v294
        %v1045 = vunpack.c.l.b16 %v295
        %v1046 = vunpack.c.h.b16 %v295
        %v1047 = vunpack.c.l.b16 %v296
        %v1048 = vunpack.c.h.b16 %v296
        %v1049 = vunpack.c.l.b16 %v297
        %v1050 = vunpack.c.h.b16 %v297
        %v1051 = vunpack.c.l.b16 %v298
        %v1052 = vunpack.c.h.b16 %v298
        %v1053 = vunpack.c.l.b16 %v299
        %v1054 = vunpack.c.h.b16 %v299
        %v1055 = vunpack.c.l.b16 %v300
        %v1056 = vunpack.c.h.b16 %v300
        %v1057 = vunpack.c.l.b16 %v301
        %v1058 = vunpack.c.h.b16 %v301
        %v1059 = vunpack.c.l.b16 %v302
        %v1060 = vunpack.c.h.b16 %v302
        %v1061 = vunpack.c.l.b16 %v303
        %v1062 = vunpack.c.h.b16 %v303
        %v1063 = vunpack.c.l.b16 %v304
        %v1064 = vunpack.c.h.b16 %v304
        %v1065 = vunpack.c.l.b16 %v305
        %v1066 = vunpack.c.h.b16 %v305
        %v1067 = vunpack.c.l.b16 %v306
        %v1068 = vunpack.c.h.b16 %v306
        %v1069 = vunpack.c.l.b16 %v307
        %v1070 = vunpack.c.h.b16 %v307
        %v1071 = vunpack.c.l.b16 %v308
        %v1072 = vunpack.c.h.b16 %v308
        %v1073 = vunpack.c.l.b16 %v309
        %v1074 = vunpack.c.h.b16 %v309
        %v1075 = vunpack.c.l.b16 %v310
        %v1076 = vunpack.c.h.b16 %v310
        %v1077 = vunpack.c.l.b16 %v311
        %v1078 = vunpack.c.h.b16 %v311
        %v1079 = vunpack.c.l.b16 %v312
        %v1080 = vunpack.c.h.b16 %v312
        %v1081 = vunpack.c.l.b16 %v313
        %v1082 = vunpack.c.h.b16 %v313
        %v1083 = vunpack.c.l.b16 %v314
        %v1084 = vunpack.c.h.b16 %v314
        %v1085 = vunpack.c.l.b16 %v315
        %v1086 = vunpack.c.h.b16 %v315
        %v1087 = vunpack.c.l.b16 %v316
        %v1088 = vunpack.c.h.b16 %v316
        %v1089 = vunpack.c.l.b16 %v317
        %v1090 = vunpack.c.h.b16 %v317
        %v1091 = vunpack.c.l.b16 %v318
        %v1092 = vunpack.c.h.b16 %v318
        %v1093 = vunpack.c.l.b16 %v319
        %v1094 = vunpack.c.h.b16 %v319
        %v1095 = vunpack.c.l.b16 %v320
        %v1096 = vunpack.c.h.b16 %v320
        %v1097 = vunpack.c.l.b16 %v321
        %v1098 = vunpack.c.h.b16 %v321
        %v1099 = vunpack.c.l.b16 %v322
        %v1100 = vunpack.c.h.b16 %v322
        %v1101 = vunpack.c.l.b16 %v323
        %v1102 = vunpack.c.h.b16 %v323
        %v1103 = vunpack.c.l.b16 %v324
        %v1104 = vunpack.c.h.b16 %v324
        %v1105 = vunpack.c.l.b16 %v325
        %v1106 = vunpack.c.h.b16 %v325
        %v1107 = vunpack.c.l.b16 %v326
        %v1108 = vunpack.c.h.b16 %v326
        %v1109 = vunpack.c.l.b16 %v327
        %v1110 = vunpack.c.h.b16 %v327
        %v1111 = vunpack.c.l.b16 %v328
        %v1112 = vunpack.c.h.b16 %v328
        %v1113 = vunpack.c.l.b16 %v329
        %v1114 = vunpack.c.h.b16 %v329
        %v1115 = vunpack.c.l.b16 %v330
        %v1116 = vunpack.c.h.b16 %v330
        %v1117 = vunpack.c.l.b16 %v331
        %v1118 = vunpack.c.h.b16 %v331
        %v1119 = vunpack.c.l.b16 %v332
        %v1120 = vunpack.c.h.b16 %v332
        %v1121 = vunpack.c.l.b16 %v333
        %v1122 = vunpack.c.h.b16 %v333
        %v1123 = vunpack.c.l.b16 %v334
        %v1124 = vunpack.c.h.b16 %v334
        %v1125 = vunpack.c.l.b16 %v335
        %v1126 = vunpack.c.h.b16 %v335
        %v1127 = vunpack.c.l.b16 %v336
        %v1128 = vunpack.c.h.b16 %v336
        %v1129 = vunpack.c.l.b16 %v337
        %v1130 = vunpack.c.h.b16 %v337
        %v1131 = vunpack.c.l.b16 %v338
        %v1132 = vunpack.c.h.b16 %v338
        %v1133 = vunpack.c.l.b16 %v339
        %v1134 = vunpack.c.h.b16 %v339
        %v1135 = vunpack.c.l.b16 %v340
        %v1136 = vunpack.c.h.b16 %v340
        %v1137 = vunpack.c.l.b16 %v341
        %v1138 = vunpack.c.h.b16 %v341
        %v1139 = vunpack.c.l.b16 %v342
        %v1140 = vunpack.c.h.b16 %v342
        %v1141 = vunpack.c.l.b16 %v343
        %v1142 = vunpack.c.h.b16 %v343
        %v1143 = vunpack.c.l.b16 %v344
        %v1144 = vunpack.c.h.b16 %v344
        %v1145 = vunpack.c.l.b16 %v345
        %v1146 = vunpack.c.h.b16 %v345
        %v1147 = vunpack.c.l.b16 %v346
        %v1148 = vunpack.c.h.b16 %v346
        %v1149 = vunpack.c.l.b16 %v347
        %v1150 = vunpack.c.h.b16 %v347
        %v1151 = vunpack.c.l.b16 %v348
        %v1152 = vunpack.c.h.b16 %v348
        %v1153 = vunpack.c.l.b16 %v349
        %v1154 = vunpack.c.h.b16 %v349
        %v1155 = vunpack.c.l.b16 %v350
        %v1156 = vunpack.c.h.b16 %v350
        %v1157 = vunpack.c.l.b16 %v351
        %v1158 = vunpack.c.h.b16 %v351
        %v1159 = vunpack.c.l.b16 %v352
        %v1160 = vunpack.c.h.b16 %v352
        %v1161 = vunpack.c.l.b16 %v353
        %v1162 = vunpack.c.h.b16 %v353
        %v1163 = vunpack.c.l.b16 %v354
        %v1164 = vunpack.c.h.b16 %v354
        %v1165 = vunpack.c.l.b16 %v355
        %v1166 = vunpack.c.h.b16 %v355
        %v1167 = vunpack.c.l.b16 %v356
        %v1168 = vunpack.c.h.b16 %v356
        %v1169 = vunpack.c.l.b16 %v357
        %v1170 = vunpack.c.h.b16 %v357
        %v1171 = vunpack.c.l.b16 %v358
        %v1172 = vunpack.c.h.b16 %v358
        %v1173 = vunpack.c.l.b16 %v359
        %v1174 = vunpack.c.h.b16 %v359
        %v1175 = vunpack.c.l.b16 %v360
        %v1176 = vunpack.c.h.b16 %v360
        %v1177 = vunpack.c.l.b16 %v361
        %v1178 = vunpack.c.h.b16 %v361
        %v1179 = vunpack.c.l.b16 %v362
        %v1180 = vunpack.c.h.b16 %v362
        %v1181 = vunpack.c.l.b16 %v363
        %v1182 = vunpack.c.h.b16 %v363
        %v1183 = vunpack.c.l.b16 %v364
        %v1184 = vunpack.c.h.b16 %v364
        %v1185 = vunpack.c.l.b16 %v365
        %v1186 = vunpack.c.h.b16 %v365
        %v1187 = vunpack.c.l.b16 %v366
        %v1188 = vunpack.c.h.b16 %v366
        %v1189 = vunpack.c.l.b16 %v367
        %v1190 = vunpack.c.h.b16 %v367
        %v1191 = vunpack.c.l.b16 %v368
        %v1192 = vunpack.c.h.b16 %v368
        %v1193 = vunpack.c.l.b16 %v369
        %v1194 = vunpack.c.h.b16 %v369
        %v1195 = vunpack.c.l.b16 %v370
        %v1196 = vunpack.c.h.b16 %v370
        %v1197 = vunpack.c.l.b16 %v371
        %v1198 = vunpack.c.h.b16 %v371
        %v1199 = vunpack.c.l.b16 %v372
        %v1200 = vunpack.c.h.b16 %v372
        %v1201 = vunpack.c.l.b16 %v373
        %v1202 = vunpack.c.h.b16 %v373
        %v1203 = vunpack.c.l.b16 %v374
        %v1204 = vunpack.c.h.b16 %v374
        %v1205 = vunpack.c.l.b16 %v375
        %v1206 = vunpack.c.h.b16 %v375
        %v1207 = vunpack.c.l.b16 %v376
        %v1208 = vunpack.c.h.b16 %v376
        %v1209 = vunpack.c.l.b16 %v377
        %v1210 = vunpack.c.h.b16 %v377
        %v1211 = vunpack.c.l.b16 %v378
        %v1212 = vunpack.c.h.b16 %v378
        %v1213 = vunpack.c.l.b16 %v379
        %v1214 = vunpack.c.h.b16 %v379
        %v1215 = vunpack.c.l.b16 %v380
        %v1216 = vunpack.c.h.b16 %v380
        %v1217 = vunpack.c.l.b16 %v381
        %v1218 = vunpack.c.h.b16 %v381
        %v1219 = vunpack.c.l.b16 %v382
        %v1220 = vunpack.c.h.b16 %v382
        %v1221 = vunpack.c.l.b16 %v383
        %v1222 = vunpack.c.h.b16 %v383
        %v1223 = vunpack.c.l.b16 %v384
        %v1224 = vunpack.c.h.b16 %v384
        %v1225 = vunpack.c.l.b16 %v385
        %v1226 = vunpack.c.h.b16 %v385
        %v1227 = vunpack.c.l.b16 %v386
        %v1228 = vunpack.c.h.b16 %v386
        %v1229 = vunpack.c.l.b16 %v387
        %v1230 = vunpack.c.h.b16 %v387
        %v1231 = vunpack.c.l.b16 %v388
        %v1232 = vunpack.c.h.b16 %v388
        %v1233 = vunpack.c.l.b16 %v389
        %v1234 = vunpack.c.h.b16 %v389
        %v1235 = vunpack.c.l.b16 %v390
        %v1236 = vunpack.c.h.b16 %v390
        %v1237 = vunpack.c.l.b16 %v391
        %v1238 = vunpack.c.h.b16 %v391
        %v1239 = vunpack.c.l.b16 %v392
        %v1240 = vunpack.c.h.b16 %v392
        %v1241 = vunpack.c.l.b16 %v393
        %v1242 = vunpack.c.h.b16 %v393
        %v1243 = vunpack.c.l.b16 %v394
        %v1244 = vunpack.c.h.b16 %v394
        %v1245 = vunpack.c.l.b16 %v395
        %v1246 = vunpack.c.h.b16 %v395
        %v1247 = vunpack.c.l.b16 %v396
        %v1248 = vunpack.c.h.b16 %v396
        %v1249 = vunpack.c.l.b16 %v397
        %v1250 = vunpack.c.h.b16 %v397
        %v1251 = vunpack.c.l.b16 %v398
        %v1252 = vunpack.c.h.b16 %v398
        %v1253 = vunpack.c.l.b16 %v399
        %v1254 = vunpack.c.h.b16 %v399
        %v1255 = vunpack.c.l.b16 %v400
        %v1256 = vunpack.c.h.b16 %v400
        %v1257 = vunpack.c.l.b16 %v401
        %v1258 = vunpack.c.h.b16 %v401
        %v1259 = vunpack.c.l.b16 %v402
        %v1260 = vunpack.c.h.b16 %v402
        %v1261 = vunpack.c.l.b16 %v403
        %v1262 = vunpack.c.h.b16 %v403
        %v1263 = vunpack.c.l.b16 %v404
        %v1264 = vunpack.c.h.b16 %v404
        %v1265 = vunpack.c.l.b16 %v405
        %v1266 = vunpack.c.h.b16 %v405
        %v1267 = vunpack.c.l.b16 %v406
        %v1268 = vunpack.c.h.b16 %v406
        %v1269 = vunpack.c.l.b16 %v407
        %v1270 = vunpack.c.h.b16 %v407
        %v1271 = vunpack.c.l.b16 %v408
        %v1272 = vunpack.c.h.b16 %v408
        %v1273 = vunpack.c.l.b16 %v409
        %v1274 = vunpack.c.h.b16 %v409
        %v1275 = vunpack.c.l.b16 %v410
        %v1276 = vunpack.c.h.b16 %v410
        %v1277 = vunpack.c.l.b16 %v411
        %v1278 = vunpack.c.h.b16 %v411
        %v1279 = vunpack.c.l.b16 %v412
        %v1280 = vunpack.c.h.b16 %v412
        %v1281 = vunpack.c.l.b16 %v413
        %v1282 = vunpack.c.h.b16 %v413
        %v1283 = vunpack.c.l.b16 %v414
        %v1284 = vunpack.c.h.b16 %v414
        %v1285 = vunpack.c.l.b16 %v415
        %v1286 = vunpack.c.h.b16 %v415
        %v1287 = vunpack.c.l.b16 %v416
        %v1288 = vunpack.c.h.b16 %v416
        %v1289 = vunpack.c.l.b16 %v417
        %v1290 = vunpack.c.h.b16 %v417
        %v1291 = vunpack.c.l.b16 %v418
        %v1292 = vunpack.c.h.b16 %v418
        %v1293 = vunpack.c.l.b16 %v419
        %v1294 = vunpack.c.h.b16 %v419
        %v1295 = vunpack.c.l.b16 %v420
        %v1296 = vunpack.c.h.b16 %v420
        %v1297 = vunpack.c.l.b16 %v421
        %v1298 = vunpack.c.h.b16 %v421
        %v1299 = vunpack.c.l.b16 %v422
        %v1300 = vunpack.c.h.b16 %v422
        %v1301 = vunpack.c.l.b16 %v423
        %v1302 = vunpack.c.h.b16 %v423
        %v1303 = vunpack.c.l.b16 %v424
        %v1304 = vunpack.c.h.b16 %v424
        %v1305 = vunpack.c.l.b16 %v425
        %v1306 = vunpack.c.h.b16 %v425
        %v1307 = vunpack.c.l.b16 %v426
        %v1308 = vunpack.c.h.b16 %v426
        %v1309 = vunpack.c.l.b16 %v427
        %v1310 = vunpack.c.h.b16 %v427
        %v1311 = vunpack.c.l.b16 %v428
        %v1312 = vunpack.c.h.b16 %v428
        %v1313 = vunpack.c.l.b16 %v429
        %v1314 = vunpack.c.h.b16 %v429
        %v1315 = vunpack.c.l.b16 %v430
        %v1316 = vunpack.c.h.b16 %v430
        %v1317 = vunpack.c.l.b16 %v431
        %v1318 = vunpack.c.h.b16 %v431
        %v1319 = vunpack.c.l.b16 %v432
        %v1320 = vunpack.c.h.b16 %v432
        %v1321 = vunpack.c.l.b16 %v433
        %v1322 = vunpack.c.h.b16 %v433
        %v1323 = vunpack.c.l.b16 %v434
        %v1324 = vunpack.c.h.b16 %v434
        %v1325 = vunpack.c.l.b16 %v435
        %v1326 = vunpack.c.h.b16 %v435
        %v1327 = vunpack.c.l.b16 %v436
        %v1328 = vunpack.c.h.b16 %v436
        %v1329 = vunpack.c.l.b16 %v437
        %v1330 = vunpack.c.h.b16 %v437
        %v1331 = vunpack.c.l.b16 %v438
        %v1332 = vunpack.c.h.b16 %v438
        %v1333 = vunpack.c.l.b16 %v439
        %v1334 = vunpack.c.h.b16 %v439
        %v1335 = vunpack.c.l.b16 %v440
        %v1336 = vunpack.c.h.b16 %v440
        %v1337 = vunpack.c.l.b16 %v441
        %v1338 = vunpack.c.h.b16 %v441
        %v1339 = vunpack.c.l.b16 %v442
        %v1340 = vunpack.c.h.b16 %v442
        %v1341 = vunpack.c.l.b16 %v443
        %v1342 = vunpack.c.h.b16 %v443
        %v1343 = vunpack.c.l.b16 %v444
        %v1344 = vunpack.c.h.b16 %v444
        %v1345 = vunpack.c.l.b16 %v445
        %v1346 = vunpack.c.h.b16 %v445
        %v1347 = vunpack.c.l.b16 %v446
        %v1348 = vunpack.c.h.b16 %v446
        %v1349 = vunpack.c.l.b16 %v447
        %v1350 = vunpack.c.h.b16 %v447
        %v1351 = vunpack.c.l.b16 %v448
        %v1352 = vunpack.c.h.b16 %v448
        %v1353 = vunpack.c.l.b16 %v449
        %v1354 = vunpack.c.h.b16 %v449
        %v1355 = vunpack.c.l.b16 %v450
        %v1356 = vunpack.c.h.b16 %v450
        %v1357 = vunpack.c.l.b16 %v451
        %v1358 = vunpack.c.h.b16 %v451
        %v1359 = vunpack.c.l.b16 %v452
        %v1360 = vunpack.c.h.b16 %v452
        %v1361 = vunpack.c.l.b16 %v453
        %v1362 = vunpack.c.h.b16 %v453
        %v1363 = vunpack.c.l.b16 %v454
        %v1364 = vunpack.c.h.b16 %v454
        %v1365 = vunpack.c.l.b16 %v455
        %v1366 = vunpack.c.h.b16 %v455
        %v1367 = vunpack.c.l.b16 %v456
        %v1368 = vunpack.c.h.b16 %v456
        %v1369 = vunpack.c.l.b16 %v457
        %v1370 = vunpack.c.h.b16 %v457
        %v1371 = vunpack.c.l.b16 %v458
        %v1372 = vunpack.c.h.b16 %v458
        %v1373 = vunpack.c.l.b16 %v459
        %v1374 = vunpack.c.h.b16 %v459
        %v1375 = vunpack.c.l.b16 %v460
        %v1376 = vunpack.c.h.b16 %v460
        %v1377 = vunpack.c.l.b16 %v461
        %v1378 = vunpack.c.h.b16 %v461
        %v1379 = vunpack.c.l.b16 %v462
        %v1380 = vunpack.c.h.b16 %v462
        %v1381 = vunpack.c.l.b16 %v463
        %v1382 = vunpack.c.h.b16 %v463
        %v1383 = vunpack.c.l.b16 %v464
        %v1384 = vunpack.c.h.b16 %v464
        %v1385 = vunpack.c.l.b16 %v465
        %v1386 = vunpack.c.h.b16 %v465
        %v1387 = vunpack.c.l.b16 %v466
        %v1388 = vunpack.c.h.b16 %v466
        %v1389 = vunpack.c.l.b16 %v467
        %v1390 = vunpack.c.h.b16 %v467
        %v1391 = vunpack.c.l.b16 %v468
        %v1392 = vunpack.c.h.b16 %v468
        %v1393 = vunpack.c.l.b16 %v469
        %v1394 = vunpack.c.h.b16 %v469
        %v1395 = vunpack.c.l.b16 %v470
        %v1396 = vunpack.c.h.b16 %v470
        %v1397 = vunpack.c.l.b16 %v471
        %v1398 = vunpack.c.h.b16 %v471
        %v1399 = vunpack.c.l.b16 %v472
        %v1400 = vunpack.c.h.b16 %v472
        %v1401 = vpack.c.b16 %v893, %v889
        %v1402 = vpack.c.b16 %v894, %v890
        %v1403 = vpack.c.b16 %v895, %v891
        %v1404 = vpack.c.b16 %v896, %v892
        %v1405 = vpack.c.b16 %v901, %v897
        %v1406 = vpack.c.b16 %v902, %v898
        %v1407 = vpack.c.b16 %v903, %v899
        %v1408 = vpack.c.b16 %v904, %v900
        %v1409 = vpack.c.b16 %v909, %v905
        %v1410 = vpack.c.b16 %v910, %v906
        %v1411 = vpack.c.b16 %v911, %v907
        %v1412 = vpack.c.b16 %v912, %v908
        %v1413 = vpack.c.b16 %v917, %v913
        %v1414 = vpack.c.b16 %v918, %v914
        %v1415 = vpack.c.b16 %v919, %v915
        %v1416 = vpack.c.b16 %v920, %v916
        %v1417 = vpack.c.b16 %v925, %v921
        %v1418 = vpack.c.b16 %v926, %v922
        %v1419 = vpack.c.b16 %v927, %v923
        %v1420 = vpack.c.b16 %v928, %v924
        %v1421 = vpack.c.b16 %v933, %v929
        %v1422 = vpack.c.b16 %v934, %v930
        %v1423 = vpack.c.b16 %v935, %v931
        %v1424 = vpack.c.b16 %v936, %v932
        %v1425 = vpack.c.b16 %v941, %v937
        %v1426 = vpack.c.b16 %v942, %v938
        %v1427 = vpack.c.b16 %v943, %v939
        %v1428 = vpack.c.b16 %v944, %v940
        %v1429 = vpack.c.b16 %v949, %v945
        %v1430 = vpack.c.b16 %v950, %v946
        %v1431 = vpack.c.b16 %v951, %v947
        %v1432 = vpack.c.b16 %v952, %v948
        %v1433 = vpack.c.b16 %v957, %v953
        %v1434 = vpack.c.b16 %v958, %v954
        %v1435 = vpack.c.b16 %v959, %v955
        %v1436 = vpack.c.b16 %v960, %v956
        %v1437 = vpack.c.b16 %v965, %v961
        %v1438 = vpack.c.b16 %v966, %v962
        %v1439 = vpack.c.b16 %v967, %v963
        %v1440 = vpack.c.b16 %v968, %v964
        %v1441 = vpack.c.b16 %v973, %v969
        %v1442 = vpack.c.b16 %v974, %v970
        %v1443 = vpack.c.b16 %v975, %v971
        %v1444 = vpack.c.b16 %v976, %v972
        %v1445 = vpack.c.b16 %v981, %v977
        %v1446 = vpack.c.b16 %v982, %v978
        %v1447 = vpack.c.b16 %v983, %v979
        %v1448 = vpack.c.b16 %v984, %v980
        %v1449 = vpack.c.b16 %v989, %v985
        %v1450 = vpack.c.b16 %v990, %v986
        %v1451 = vpack.c.b16 %v991, %v987
        %v1452 = vpack.c.b16 %v992, %v988
        %v1453 = vpack.c.b16 %v997, %v993
        %v1454 = vpack.c.b16 %v998, %v994
        %v1455 = vpack.c.b16 %v999, %v995
        %v1456 = vpack.c.b16 %v1000, %v996
        %v1457 = vpack.c.b16 %v1005, %v1001
        %v1458 = vpack.c.b16 %v1006, %v1002
        %v1459 = vpack.c.b16 %v1007, %v1003
        %v1460 = vpack.c.b16 %v1008, %v1004
        %v1461 = vpack.c.b16 %v1013, %v1009
        %v1462 = vpack.c.b16 %v1014, %v1010
        %v1463 = vpack.c.b16 %v1015, %v1011
        %v1464 = vpack.c.b16 %v1016, %v1012
        %v1465 = vpack.c.b16 %v1021, %v1017
        %v1466 = vpack.c.b16 %v1022, %v1018
        %v1467 = vpack.c.b16 %v1023, %v1019
        %v1468 = vpack.c.b16 %v1024, %v1020
        %v1469 = vpack.c.b16 %v1029, %v1025
        %v1470 = vpack.c.b16 %v1030, %v1026
        %v1471 = vpack.c.b16 %v1031, %v1027
        %v1472 = vpack.c.b16 %v1032, %v1028
        %v1473 = vpack.c.b16 %v1037, %v1033
        %v1474 = vpack.c.b16 %v1038, %v1034
        %v1475 = vpack.c.b16 %v1039, %v1035
        %v1476 = vpack.c.b16 %v1040, %v1036
        %v1477 = vpack.c.b16 %v1045, %v1041
        %v1478 = vpack.c.b16 %v1046, %v1042
        %v1479 = vpack.c.b16 %v1047, %v1043
        %v1480 = vpack.c.b16 %v1048, %v1044
        %v1481 = vpack.c.b16 %v1053, %v1049
        %v1482 = vpack.c.b16 %v1054, %v1050
        %v1483 = vpack.c.b16 %v1055, %v1051
        %v1484 = vpack.c.b16 %v1056, %v1052
        %v1485 = vpack.c.b16 %v1061, %v1057
        %v1486 = vpack.c.b16 %v1062, %v1058
        %v1487 = vpack.c.b16 %v1063, %v1059
        %v1488 = vpack.c.b16 %v1064, %v1060
        %v1489 = vpack.c.b16 %v1069, %v1065
        %v1490 = vpack.c.b16 %v1070, %v1066
        %v1491 = vpack.c.b16 %v1071, %v1067
        %v1492 = vpack.c.b16 %v1072, %v1068
        %v1493 = vpack.c.b16 %v1077, %v1073
        %v1494 = vpack.c.b16 %v1078, %v1074
        %v1495 = vpack.c.b16 %v1079, %v1075
        %v1496 = vpack.c.b16 %v1080, %v1076
        %v1497 = vpack.c.b16 %v1085, %v1081
        %v1498 = vpack.c.b16 %v1086, %v1082
        %v1499 = vpack.c.b16 %v1087, %v1083
        %v1500 = vpack.c.b16 %v1088, %v1084
        %v1501 = vpack.c.b16 %v1093, %v1089
        %v1502 = vpack.c.b16 %v1094, %v1090
        %v1503 = vpack.c.b16 %v1095, %v1091
        %v1504 = vpack.c.b16 %v1096, %v1092
        %v1505 = vpack.c.b16 %v1101, %v1097
        %v1506 = vpack.c.b16 %v1102, %v1098
        %v1507 = vpack.c.b16 %v1103, %v1099
        %v1508 = vpack.c.b16 %v1104, %v1100
        %v1509 = vpack.c.b16 %v1109, %v1105
        %v1510 = vpack.c.b16 %v1110, %v1106
        %v1511 = vpack.c.b16 %v1111, %v1107
        %v1512 = vpack.c.b16 %v1112, %v1108
        %v1513 = vpack.c.b16 %v1117, %v1113
        %v1514 = vpack.c.b16 %v1118, %v1114
        %v1515 = vpack.c.b16 %v1119, %v1115
        %v1516 = vpack.c.b16 %v1120, %v1116
        %v1517 = vpack.c.b16 %v1125, %v1121
        %v1518 = vpack.c.b16 %v1126, %v1122
        %v1519 = vpack.c.b16 %v1127, %v1123
        %v1520 = vpack.c.b16 %v1128, %v1124
        %v1521 = vpack.c.b16 %v1133, %v1129
        %v1522 = vpack.c.b16 %v1134, %v1130
        %v1523 = vpack.c.b16 %v1135, %v1131
        %v1524 = vpack.c.b16 %v1136, %v1132
        %v1525 = vpack.c.b16 %v1141, %v1137
        %v1526 = vpack.c.b16 %v1142, %v1138
        %v1527 = vpack.c.b16 %v1143, %v1139
        %v1528 = vpack.c.b16 %v1144, %v1140
        %v1529 = vpack.c.b16 %v1149, %v1145
        %v1530 = vpack.c.b16 %v1150, %v1146
        %v1531 = vpack.c.b16 %v1151, %v1147
        %v1532 = vpack.c.b16 %v1152, %v1148
        %v1533 = vpack.c.b16 %v1157, %v1153
        %v1534 = vpack.c.b16 %v1158, %v1154
        %v1535 = vpack.c.b16 %v1159, %v1155
        %v1536 = vpack.c.b16 %v1160, %v1156
        %v1537 = vpack.c.b16 %v1165, %v1161
        %v1538 = vpack.c.b16 %v1166, %v1162
        %v1539 = vpack.c.b16 %v1167, %v1163
        %v1540 = vpack.c.b16 %v1168, %v1164
        %v1541 = vpack.c.b16 %v1173, %v1169
        %v1542 = vpack.c.b16 %v1174, %v1170
        %v1543 = vpack.c.b16 %v1175, %v1171
        %v1544 = vpack.c.b16 %v1176, %v1172
        %v1545 = vpack.c.b16 %v1181, %v1177
        %v1546 = vpack.c.b16 %v1182, %v1178
        %v1547 = vpack.c.b16 %v1183, %v1179
        %v1548 = vpack.c.b16 %v1184, %v1180
        %v1549 = vpack.c.b16 %v1189, %v1185
        %v1550 = vpack.c.b16 %v1190, %v1186
        %v1551 = vpack.c.b16 %v1191, %v1187
        %v1552 = vpack.c.b16 %v1192, %v1188
        %v1553 = vpack.c.b16 %v1197, %v1193
        %v1554 = vpack.c.b16 %v1198, %v1194
        %v1555 = vpack.c.b16 %v1199, %v1195
        %v1556 = vpack.c.b16 %v1200, %v1196
        %v1557 = vpack.c.b16 %v1205, %v1201
        %v1558 = vpack.c.b16 %v1206, %v1202
        %v1559 = vpack.c.b16 %v1207, %v1203
        %v1560 = vpack.c.b16 %v1208, %v1204
        %v1561 = vpack.c.b16 %v1213, %v1209
        %v1562 = vpack.c.b16 %v1214, %v1210
        %v1563 = vpack.c.b16 %v1215, %v1211
        %v1564 = vpack.c.b16 %v1216, %v1212
        %v1565 = vpack.c.b16 %v1221, %v1217
        %v1566 = vpack.c.b16 %v1222, %v1218
        %v1567 = vpack.c.b16 %v1223, %v1219
        %v1568 = vpack.c.b16 %v1224, %v1220
        %v1569 = vpack.c.b16 %v1229, %v1225
        %v1570 = vpack.c.b16 %v1230, %v1226
        %v1571 = vpack.c.b16 %v1231, %v1227
        %v1572 = vpack.c.b16 %v1232, %v1228
        %v1573 = vpack.c.b16 %v1237, %v1233
        %v1574 = vpack.c.b16 %v1238, %v1234
        %v1575 = vpack.c.b16 %v1239, %v1235
        %v1576 = vpack.c.b16 %v1240, %v1236
        %v1577 = vpack.c.b16 %v1245, %v1241
        %v1578 = vpack.c.b16 %v1246, %v1242
        %v1579 = vpack.c.b16 %v1247, %v1243
        %v1580 = vpack.c.b16 %v1248, %v1244
        %v1581 = vpack.c.b16 %v1253, %v1249
        %v1582 = vpack.c.b16 %v1254, %v1250
        %v1583 = vpack.c.b16 %v1255, %v1251
        %v1584 = vpack.c.b16 %v1256, %v1252
        %v1585 = vpack.c.b16 %v1261, %v1257
        %v1586 = vpack.c.b16 %v1262, %v1258
        %v1587 = vpack.c.b16 %v1263, %v1259
        %v1588 = vpack.c.b16 %v1264, %v1260
        %v1589 = vpack.c.b16 %v1269, %v1265
        %v1590 = vpack.c.b16 %v1270, %v1266
        %v1591 = vpack.c.b16 %v1271, %v1267
        %v1592 = vpack.c.b16 %v1272, %v1268
        %v1593 = vpack.c.b16 %v1277, %v1273
        %v1594 = vpack.c.b16 %v1278, %v1274
        %v1595 = vpack.c.b16 %v1279, %v1275
        %v1596 = vpack.c.b16 %v1280, %v1276
        %v1597 = vpack.c.b16 %v1285, %v1281
        %v1598 = vpack.c.b16 %v1286, %v1282
        %v1599 = vpack.c.b16 %v1287, %v1283
        %v1600 = vpack.c.b16 %v1288, %v1284
        %v1601 = vpack.c.b16 %v1293, %v1289
        %v1602 = vpack.c.b16 %v1294, %v1290
        %v1603 = vpack.c.b16 %v1295, %v1291
        %v1604 = vpack.c.b16 %v1296, %v1292
        %v1605 = vpack.c.b16 %v1301, %v1297
        %v1606 = vpack.c.b16 %v1302, %v1298
        %v1607 = vpack.c.b16 %v1303, %v1299
        %v1608 = vpack.c.b16 %v1304, %v1300
        %v1609 = vpack.c.b16 %v1309, %v1305
        %v1610 = vpack.c.b16 %v1310, %v1306
        %v1611 = vpack.c.b16 %v1311, %v1307
        %v1612 = vpack.c.b16 %v1312, %v1308
        %v1613 = vpack.c.b16 %v1317, %v1313
        %v1614 = vpack.c.b16 %v1318, %v1314
        %v1615 = vpack.c.b16 %v1319, %v1315
        %v1616 = vpack.c.b16 %v1320, %v1316
        %v1617 = vpack.c.b16 %v1325, %v1321
        %v1618 = vpack.c.b16 %v1326, %v1322
        %v1619 = vpack.c.b16 %v1327, %v1323
        %v1620 = vpack.c.b16 %v1328, %v1324
        %v1621 = vpack.c.b16 %v1333, %v1329
        %v1622 = vpack.c.b16 %v1334, %v1330
        %v1623 = vpack.c.b16 %v1335, %v1331
        %v1624 = vpack.c.b16 %v1336, %v1332
        %v1625 = vpack.c.b16 %v1341, %v1337
        %v1626 = vpack.c.b16 %v1342, %v1338
        %v1627 = vpack.c.b16 %v1343, %v1339
        %v1628 = vpack.c.b16 %v1344, %v1340
        %v1629 = vpack.c.b16 %v1349, %v1345
        %v1630 = vpack.c.b16 %v1350, %v1346
        %v1631 = vpack.c.b16 %v1351, %v1347
        %v1632 = vpack.c.b16 %v1352, %v1348
        %v1633 = vpack.c.b16 %v1357, %v1353
        %v1634 = vpack.c.b16 %v1358, %v1354
        %v1635 = vpack.c.b16 %v1359, %v1355
        %v1636 = vpack.c.b16 %v1360, %v1356
        %v1637 = vpack.c.b16 %v1365, %v1361
        %v1638 = vpack.c.b16 %v1366, %v1362
        %v1639 = vpack.c.b16 %v1367, %v1363
        %v1640 = vpack.c.b16 %v1368, %v1364
        %v1641 = vpack.c.b16 %v1373, %v1369
        %v1642 = vpack.c.b16 %v1374, %v1370
        %v1643 = vpack.c.b16 %v1375, %v1371
        %v1644 = vpack.c.b16 %v1376, %v1372
        %v1645 = vpack.c.b16 %v1381, %v1377
        %v1646 = vpack.c.b16 %v1382, %v1378
        %v1647 = vpack.c.b16 %v1383, %v1379
        %v1648 = vpack.c.b16 %v1384, %v1380
        %v1649 = vpack.c.b16 %v1389, %v1385
        %v1650 = vpack.c.b16 %v1390, %v1386
        %v1651 = vpack.c.b16 %v1391, %v1387
        %v1652 = vpack.c.b16 %v1392, %v1388
        %v1653 = vpack.c.b16 %v1397, %v1393
        %v1654 = vpack.c.b16 %v1398, %v1394
        %v1655 = vpack.c.b16 %v1399, %v1395
        %v1656 = vpack.c.b16 %v1400, %v1396
        %1913 = vmatprep.subr.bf16.mxu0 %v1402
        %1914 = vmatpush1.bf16.msra.mxu0 %v1401
        %1915 = vmatprep.subr.bf16.mxu0 %v1406
        %1916 = vmatpush1.bf16.msra.mxu0 %v1405
        %1917 = vmatprep.subr.bf16.mxu0 %v1410
        %1918 = vmatpush1.bf16.msra.mxu0 %v1409
        %1919 = vmatprep.subr.bf16.mxu0 %v1414
        %1920 = vmatpush1.bf16.msra.mxu0 %v1413
        %1921 = vmatprep.subr.bf16.mxu0 %v1418
        %1922 = vmatpush1.bf16.msra.mxu0 %v1417
        %1923 = vmatprep.subr.bf16.mxu0 %v1422
        %1924 = vmatpush1.bf16.msra.mxu0 %v1421
        %1925 = vmatprep.subr.bf16.mxu0 %v1426
        %1926 = vmatpush1.bf16.msra.mxu0 %v1425
        %1927 = vmatprep.subr.bf16.mxu0 %v1430
        %1928 = vmatpush1.bf16.msra.mxu0 %v1429
        %1929 = vmatprep.subr.bf16.mxu0 %v1434
        %1930 = vmatpush1.bf16.msra.mxu0 %v1433
        %1931 = vmatprep.subr.bf16.mxu0 %v1438
        %1932 = vmatpush1.bf16.msra.mxu0 %v1437
        %1933 = vmatprep.subr.bf16.mxu0 %v1442
        %1934 = vmatpush1.bf16.msra.mxu0 %v1441
        %1935 = vmatprep.subr.bf16.mxu0 %v1446
        %1936 = vmatpush1.bf16.msra.mxu0 %v1445
        %1937 = vmatprep.subr.bf16.mxu0 %v1450
        %1938 = vmatpush1.bf16.msra.mxu0 %v1449
        %1939 = vmatprep.subr.bf16.mxu0 %v1454
        %1940 = vmatpush1.bf16.msra.mxu0 %v1453
        %1941 = vmatprep.subr.bf16.mxu0 %v1458
        %1942 = vmatpush1.bf16.msra.mxu0 %v1457
        %1943 = vmatprep.subr.bf16.mxu0 %v1462
        %1944 = vmatpush1.bf16.msra.mxu0 %v1461
        %1945 = vmatprep.mubr.bf16.mxu0 %v570
        %1946 = vmatmul.mubr.bf16.gmra.mrb[0].mxu0 %v569
        %v1947 = vpop.f32.mrb[0].mxu0
        %v1948 = vadd.f32 0.0, %v1947
        %v1949 = vpop.f32.mrb[0].mxu0
        %v1950 = vadd.f32 0.0, %v1949
        %v1951 = vpop.f32.mrb[0].mxu0
        %v1952 = vadd.f32 0.0, %v1951
        %v1953 = vpop.f32.mrb[0].mxu0
        %v1954 = vadd.f32 0.0, %v1953
        %1955 = vmatprep.mubr.bf16.mxu0 %v578
        %1956 = vmatmul.mubr.bf16.gmra.mrb[0].mxu0 %v577
        %v1957 = vpop.f32.mrb[0].mxu0
        %v1958 = vadd.f32 0.0, %v1957
        %v1959 = vpop.f32.mrb[0].mxu0
        %v1960 = vadd.f32 0.0, %v1959
        %v1961 = vpop.f32.mrb[0].mxu0
        %v1962 = vadd.f32 0.0, %v1961
        %v1963 = vpop.f32.mrb[0].mxu0
        %v1964 = vadd.f32 0.0, %v1963
        %1965 = vmatprep.mubr.bf16.mxu0 %v586
        %1966 = vmatmul.mubr.bf16.gmra.mrb[0].mxu0 %v585
        %v1967 = vpop.f32.mrb[0].mxu0
        %v1968 = vadd.f32 0.0, %v1967
        %v1969 = vpop.f32.mrb[0].mxu0
        %v1970 = vadd.f32 0.0, %v1969
        %v1971 = vpop.f32.mrb[0].mxu0
        %v1972 = vadd.f32 0.0, %v1971
        %v1973 = vpop.f32.mrb[0].mxu0
        %v1974 = vadd.f32 0.0, %v1973
        %1975 = vmatprep.mubr.bf16.mxu0 %v594
        %1976 = vmatmul.mubr.bf16.gmra.mrb[0].mxu0 %v593
        %v1977 = vpop.f32.mrb[0].mxu0
        %v1978 = vadd.f32 0.0, %v1977
        %v1979 = vpop.f32.mrb[0].mxu0
        %v1980 = vadd.f32 0.0, %v1979
        %v1981 = vpop.f32.mrb[0].mxu0
        %v1982 = vadd.f32 0.0, %v1981
        %v1983 = vpop.f32.mrb[0].mxu0
        %v1984 = vadd.f32 0.0, %v1983
        %1985 = vdwg.mxu0
        %1986 = vmatprep.subr.bf16.mxu0 %v1466
        %1987 = vmatpush1.bf16.msra.mxu0 %v1465
        %1988 = vmatprep.subr.bf16.mxu0 %v1470
        %1989 = vmatpush1.bf16.msra.mxu0 %v1469
        %1990 = vmatprep.subr.bf16.mxu0 %v1474
        %1991 = vmatpush1.bf16.msra.mxu0 %v1473
        %1992 = vmatprep.subr.bf16.mxu0 %v1478
        %1993 = vmatpush1.bf16.msra.mxu0 %v1477
        %1994 = vmatprep.subr.bf16.mxu0 %v1482
        %1995 = vmatpush1.bf16.msra.mxu0 %v1481
        %1996 = vmatprep.subr.bf16.mxu0 %v1486
        %1997 = vmatpush1.bf16.msra.mxu0 %v1485
        %1998 = vmatprep.subr.bf16.mxu0 %v1490
        %1999 = vmatpush1.bf16.msra.mxu0 %v1489
        %2000 = vmatprep.subr.bf16.mxu0 %v1494
        %2001 = vmatpush1.bf16.msra.mxu0 %v1493
        %2002 = vmatprep.subr.bf16.mxu0 %v1498
        %2003 = vmatpush1.bf16.msra.mxu0 %v1497
        %2004 = vmatprep.subr.bf16.mxu0 %v1502
        %2005 = vmatpush1.bf16.msra.mxu0 %v1501
        %2006 = vmatprep.subr.bf16.mxu0 %v1506
        %2007 = vmatpush1.bf16.msra.mxu0 %v1505
        %2008 = vmatprep.subr.bf16.mxu0 %v1510
        %2009 = vmatpush1.bf16.msra.mxu0 %v1509
        %2010 = vmatprep.subr.bf16.mxu0 %v1514
        %2011 = vmatpush1.bf16.msra.mxu0 %v1513
        %2012 = vmatprep.subr.bf16.mxu0 %v1518
        %2013 = vmatpush1.bf16.msra.mxu0 %v1517
        %2014 = vmatprep.subr.bf16.mxu0 %v1522
        %2015 = vmatpush1.bf16.msra.mxu0 %v1521
        %2016 = vmatprep.subr.bf16.mxu0 %v1526
        %2017 = vmatpush1.bf16.msra.mxu0 %v1525
        %2018 = vmatprep.mubr.bf16.mxu0 %v572
        %2019 = vmatmul.mubr.bf16.gmra.mrb[0].mxu0 %v571
        %v2020 = vpop.f32.mrb[0].mxu0
        %v2021 = vadd.f32 %v1948, %v2020
        %v2022 = vpop.f32.mrb[0].mxu0
        %v2023 = vadd.f32 %v1950, %v2022
        %v2024 = vpop.f32.mrb[0].mxu0
        %v2025 = vadd.f32 %v1952, %v2024
        %v2026 = vpop.f32.mrb[0].mxu0
        %v2027 = vadd.f32 %v1954, %v2026
        %2028 = vmatprep.mubr.bf16.mxu0 %v580
        %2029 = vmatmul.mubr.bf16.gmra.mrb[0].mxu0 %v579
        %v2030 = vpop.f32.mrb[0].mxu0
        %v2031 = vadd.f32 %v1958, %v2030
        %v2032 = vpop.f32.mrb[0].mxu0
        %v2033 = vadd.f32 %v1960, %v2032
        %v2034 = vpop.f32.mrb[0].mxu0
        %v2035 = vadd.f32 %v1962, %v2034
        %v2036 = vpop.f32.mrb[0].mxu0
        %v2037 = vadd.f32 %v1964, %v2036
        %2038 = vmatprep.mubr.bf16.mxu0 %v588
        %2039 = vmatmul.mubr.bf16.gmra.mrb[0].mxu0 %v587
        %v2040 = vpop.f32.mrb[0].mxu0
        %v2041 = vadd.f32 %v1968, %v2040
        %v2042 = vpop.f32.mrb[0].mxu0
        %v2043 = vadd.f32 %v1970, %v2042
        %v2044 = vpop.f32.mrb[0].mxu0
        %v2045 = vadd.f32 %v1972, %v2044
        %v2046 = vpop.f32.mrb[0].mxu0
        %v2047 = vadd.f32 %v1974, %v2046
        %2048 = vmatprep.mubr.bf16.mxu0 %v596
        %2049 = vmatmul.mubr.bf16.gmra.mrb[0].mxu0 %v595
        %v2050 = vpop.f32.mrb[0].mxu0
        %v2051 = vadd.f32 %v1978, %v2050
        %v2052 = vpop.f32.mrb[0].mxu0
        %v2053 = vadd.f32 %v1980, %v2052
        %v2054 = vpop.f32.mrb[0].mxu0
        %v2055 = vadd.f32 %v1982, %v2054
        %v2056 = vpop.f32.mrb[0].mxu0
        %v2057 = vadd.f32 %v1984, %v2056
        %2058 = vdwg.mxu0
        %2059 = vmatprep.subr.bf16.mxu0 %v1530
        %2060 = vmatpush1.bf16.msra.mxu0 %v1529
        %2061 = vmatprep.subr.bf16.mxu0 %v1534
        %2062 = vmatpush1.bf16.msra.mxu0 %v1533
        %2063 = vmatprep.subr.bf16.mxu0 %v1538
        %2064 = vmatpush1.bf16.msra.mxu0 %v1537
        %2065 = vmatprep.subr.bf16.mxu0 %v1542
        %2066 = vmatpush1.bf16.msra.mxu0 %v1541
        %2067 = vmatprep.subr.bf16.mxu0 %v1546
        %2068 = vmatpush1.bf16.msra.mxu0 %v1545
        %2069 = vmatprep.subr.bf16.mxu0 %v1550
        %2070 = vmatpush1.bf16.msra.mxu0 %v1549
        %2071 = vmatprep.subr.bf16.mxu0 %v1554
        %2072 = vmatpush1.bf16.msra.mxu0 %v1553
        %2073 = vmatprep.subr.bf16.mxu0 %v1558
        %2074 = vmatpush1.bf16.msra.mxu0 %v1557
        %2075 = vmatprep.subr.bf16.mxu0 %v1562
        %2076 = vmatpush1.bf16.msra.mxu0 %v1561
        %2077 = vmatprep.subr.bf16.mxu0 %v1566
        %2078 = vmatpush1.bf16.msra.mxu0 %v1565
        %2079 = vmatprep.subr.bf16.mxu0 %v1570
        %2080 = vmatpush1.bf16.msra.mxu0 %v1569
        %2081 = vmatprep.subr.bf16.mxu0 %v1574
        %2082 = vmatpush1.bf16.msra.mxu0 %v1573
        %2083 = vmatprep.subr.bf16.mxu0 %v1578
        %2084 = vmatpush1.bf16.msra.mxu0 %v1577
        %2085 = vmatprep.subr.bf16.mxu0 %v1582
        %2086 = vmatpush1.bf16.msra.mxu0 %v1581
        %2087 = vmatprep.subr.bf16.mxu0 %v1586
        %2088 = vmatpush1.bf16.msra.mxu0 %v1585
        %2089 = vmatprep.subr.bf16.mxu0 %v1590
        %2090 = vmatpush1.bf16.msra.mxu0 %v1589
        %2091 = vmatprep.mubr.bf16.mxu0 %v574
        %2092 = vmatmul.mubr.bf16.gmra.mrb[0].mxu0 %v573
        %v2093 = vpop.f32.mrb[0].mxu0
        %v2094 = vadd.f32 %v2021, %v2093
        %v2095 = vpop.f32.mrb[0].mxu0
        %v2096 = vadd.f32 %v2023, %v2095
        %v2097 = vpop.f32.mrb[0].mxu0
        %v2098 = vadd.f32 %v2025, %v2097
        %v2099 = vpop.f32.mrb[0].mxu0
        %v2100 = vadd.f32 %v2027, %v2099
        %2101 = vmatprep.mubr.bf16.mxu0 %v582
        %2102 = vmatmul.mubr.bf16.gmra.mrb[0].mxu0 %v581
        %v2103 = vpop.f32.mrb[0].mxu0
        %v2104 = vadd.f32 %v2031, %v2103
        %v2105 = vpop.f32.mrb[0].mxu0
        %v2106 = vadd.f32 %v2033, %v2105
        %v2107 = vpop.f32.mrb[0].mxu0
        %v2108 = vadd.f32 %v2035, %v2107
        %v2109 = vpop.f32.mrb[0].mxu0
        %v2110 = vadd.f32 %v2037, %v2109
        %2111 = vmatprep.mubr.bf16.mxu0 %v590
        %2112 = vmatmul.mubr.bf16.gmra.mrb[0].mxu0 %v589
        %v2113 = vpop.f32.mrb[0].mxu0
        %v2114 = vadd.f32 %v2041, %v2113
        %v2115 = vpop.f32.mrb[0].mxu0
        %v2116 = vadd.f32 %v2043, %v2115
        %v2117 = vpop.f32.mrb[0].mxu0
        %v2118 = vadd.f32 %v2045, %v2117
        %v2119 = vpop.f32.mrb[0].mxu0
        %v2120 = vadd.f32 %v2047, %v2119
        %2121 = vmatprep.mubr.bf16.mxu0 %v598
        %2122 = vmatmul.mubr.bf16.gmra.mrb[0].mxu0 %v597
        %v2123 = vpop.f32.mrb[0].mxu0
        %v2124 = vadd.f32 %v2051, %v2123
        %v2125 = vpop.f32.mrb[0].mxu0
        %v2126 = vadd.f32 %v2053, %v2125
        %v2127 = vpop.f32.mrb[0].mxu0
        %v2128 = vadd.f32 %v2055, %v2127
        %v2129 = vpop.f32.mrb[0].mxu0
        %v2130 = vadd.f32 %v2057, %v2129
        %2131 = vdwg.mxu0
        %2132 = vmatprep.subr.bf16.mxu0 %v1594
        %2133 = vmatpush1.bf16.msra.mxu0 %v1593
        %2134 = vmatprep.subr.bf16.mxu0 %v1598
        %2135 = vmatpush1.bf16.msra.mxu0 %v1597
        %2136 = vmatprep.subr.bf16.mxu0 %v1602
        %2137 = vmatpush1.bf16.msra.mxu0 %v1601
        %2138 = vmatprep.subr.bf16.mxu0 %v1606
        %2139 = vmatpush1.bf16.msra.mxu0 %v1605
        %2140 = vmatprep.subr.bf16.mxu0 %v1610
        %2141 = vmatpush1.bf16.msra.mxu0 %v1609
        %2142 = vmatprep.subr.bf16.mxu0 %v1614
        %2143 = vmatpush1.bf16.msra.mxu0 %v1613
        %2144 = vmatprep.subr.bf16.mxu0 %v1618
        %2145 = vmatpush1.bf16.msra.mxu0 %v1617
        %2146 = vmatprep.subr.bf16.mxu0 %v1622
        %2147 = vmatpush1.bf16.msra.mxu0 %v1621
        %2148 = vmatprep.subr.bf16.mxu0 %v1626
        %2149 = vmatpush1.bf16.msra.mxu0 %v1625
        %2150 = vmatprep.subr.bf16.mxu0 %v1630
        %2151 = vmatpush1.bf16.msra.mxu0 %v1629
        %2152 = vmatprep.subr.bf16.mxu0 %v1634
        %2153 = vmatpush1.bf16.msra.mxu0 %v1633
        %2154 = vmatprep.subr.bf16.mxu0 %v1638
        %2155 = vmatpush1.bf16.msra.mxu0 %v1637
        %2156 = vmatprep.subr.bf16.mxu0 %v1642
        %2157 = vmatpush1.bf16.msra.mxu0 %v1641
        %2158 = vmatprep.subr.bf16.mxu0 %v1646
        %2159 = vmatpush1.bf16.msra.mxu0 %v1645
        %2160 = vmatprep.subr.bf16.mxu0 %v1650
        %2161 = vmatpush1.bf16.msra.mxu0 %v1649
        %2162 = vmatprep.subr.bf16.mxu0 %v1654
        %2163 = vmatpush1.bf16.msra.mxu0 %v1653
        %2164 = vmatprep.mubr.bf16.mxu0 %v576
        %2165 = vmatmul.mubr.bf16.gmra.mrb[0].mxu0 %v575
        %v2166 = vpop.f32.mrb[0].mxu0
        %v2167 = vadd.f32 %v2094, %v2166
        %v2168 = vpop.f32.mrb[0].mxu0
        %v2169 = vadd.f32 %v2096, %v2168
        %v2170 = vpop.f32.mrb[0].mxu0
        %v2171 = vadd.f32 %v2098, %v2170
        %v2172 = vpop.f32.mrb[0].mxu0
        %v2173 = vadd.f32 %v2100, %v2172
        %2174 = vmatprep.mubr.bf16.mxu0 %v584
        %2175 = vmatmul.mubr.bf16.gmra.mrb[0].mxu0 %v583
        %v2176 = vpop.f32.mrb[0].mxu0
        %v2177 = vadd.f32 %v2104, %v2176
        %v2178 = vpop.f32.mrb[0].mxu0
        %v2179 = vadd.f32 %v2106, %v2178
        %v2180 = vpop.f32.mrb[0].mxu0
        %v2181 = vadd.f32 %v2108, %v2180
        %v2182 = vpop.f32.mrb[0].mxu0
        %v2183 = vadd.f32 %v2110, %v2182
        %2184 = vmatprep.mubr.bf16.mxu0 %v592
        %2185 = vmatmul.mubr.bf16.gmra.mrb[0].mxu0 %v591
        %v2186 = vpop.f32.mrb[0].mxu0
        %v2187 = vadd.f32 %v2114, %v2186
        %v2188 = vpop.f32.mrb[0].mxu0
        %v2189 = vadd.f32 %v2116, %v2188
        %v2190 = vpop.f32.mrb[0].mxu0
        %v2191 = vadd.f32 %v2118, %v2190
        %v2192 = vpop.f32.mrb[0].mxu0
        %v2193 = vadd.f32 %v2120, %v2192
        %2194 = vmatprep.mubr.bf16.mxu0 %v600
        %2195 = vmatmul.mubr.bf16.gmra.mrb[0].mxu0 %v599
        %v2196 = vpop.f32.mrb[0].mxu0
        %v2197 = vadd.f32 %v2124, %v2196
        %v2198 = vpop.f32.mrb[0].mxu0
        %v2199 = vadd.f32 %v2126, %v2198
        %v2200 = vpop.f32.mrb[0].mxu0
        %v2201 = vadd.f32 %v2128, %v2200
        %v2202 = vpop.f32.mrb[0].mxu0
        %v2203 = vadd.f32 %v2130, %v2202
        %2204 = vdwg.mxu0
        %2205 = vmatprep.subr.bf16.mxu0 %v1404
        %2206 = vmatpush1.bf16.msra.mxu0 %v1403
        %2207 = vmatprep.subr.bf16.mxu0 %v1408
        %2208 = vmatpush1.bf16.msra.mxu0 %v1407
        %2209 = vmatprep.subr.bf16.mxu0 %v1412
        %2210 = vmatpush1.bf16.msra.mxu0 %v1411
        %2211 = vmatprep.subr.bf16.mxu0 %v1416
        %2212 = vmatpush1.bf16.msra.mxu0 %v1415
        %2213 = vmatprep.subr.bf16.mxu0 %v1420
        %2214 = vmatpush1.bf16.msra.mxu0 %v1419
        %2215 = vmatprep.subr.bf16.mxu0 %v1424
        %2216 = vmatpush1.bf16.msra.mxu0 %v1423
        %2217 = vmatprep.subr.bf16.mxu0 %v1428
        %2218 = vmatpush1.bf16.msra.mxu0 %v1427
        %2219 = vmatprep.subr.bf16.mxu0 %v1432
        %2220 = vmatpush1.bf16.msra.mxu0 %v1431
        %2221 = vmatprep.subr.bf16.mxu0 %v1436
        %2222 = vmatpush1.bf16.msra.mxu0 %v1435
        %2223 = vmatprep.subr.bf16.mxu0 %v1440
        %2224 = vmatpush1.bf16.msra.mxu0 %v1439
        %2225 = vmatprep.subr.bf16.mxu0 %v1444
        %2226 = vmatpush1.bf16.msra.mxu0 %v1443
        %2227 = vmatprep.subr.bf16.mxu0 %v1448
        %2228 = vmatpush1.bf16.msra.mxu0 %v1447
        %2229 = vmatprep.subr.bf16.mxu0 %v1452
        %2230 = vmatpush1.bf16.msra.mxu0 %v1451
        %2231 = vmatprep.subr.bf16.mxu0 %v1456
        %2232 = vmatpush1.bf16.msra.mxu0 %v1455
        %2233 = vmatprep.subr.bf16.mxu0 %v1460
        %2234 = vmatpush1.bf16.msra.mxu0 %v1459
        %2235 = vmatprep.subr.bf16.mxu0 %v1464
        %2236 = vmatpush1.bf16.msra.mxu0 %v1463
        %2237 = vmatprep.mubr.bf16.mxu0 %v570
        %2238 = vmatmul.mubr.bf16.gmra.mrb[0].mxu0 %v569
        %v2239 = vpop.f32.mrb[0].mxu0
        %v2240 = vadd.f32 0.0, %v2239
        %v2241 = vpop.f32.mrb[0].mxu0
        %v2242 = vadd.f32 0.0, %v2241
        %v2243 = vpop.f32.mrb[0].mxu0
        %v2244 = vadd.f32 0.0, %v2243
        %v2245 = vpop.f32.mrb[0].mxu0
        %v2246 = vadd.f32 0.0, %v2245
        %2247 = vmatprep.mubr.bf16.mxu0 %v578
        %2248 = vmatmul.mubr.bf16.gmra.mrb[0].mxu0 %v577
        %v2249 = vpop.f32.mrb[0].mxu0
        %v2250 = vadd.f32 0.0, %v2249
        %v2251 = vpop.f32.mrb[0].mxu0
        %v2252 = vadd.f32 0.0, %v2251
        %v2253 = vpop.f32.mrb[0].mxu0
        %v2254 = vadd.f32 0.0, %v2253
        %v2255 = vpop.f32.mrb[0].mxu0
        %v2256 = vadd.f32 0.0, %v2255
        %2257 = vmatprep.mubr.bf16.mxu0 %v586
        %2258 = vmatmul.mubr.bf16.gmra.mrb[0].mxu0 %v585
        %v2259 = vpop.f32.mrb[0].mxu0
        %v2260 = vadd.f32 0.0, %v2259
        %v2261 = vpop.f32.mrb[0].mxu0
        %v2262 = vadd.f32 0.0, %v2261
        %v2263 = vpop.f32.mrb[0].mxu0
        %v2264 = vadd.f32 0.0, %v2263
        %v2265 = vpop.f32.mrb[0].mxu0
        %v2266 = vadd.f32 0.0, %v2265
        %2267 = vmatprep.mubr.bf16.mxu0 %v594
        %2268 = vmatmul.mubr.bf16.gmra.mrb[0].mxu0 %v593
        %v2269 = vpop.f32.mrb[0].mxu0
        %v2270 = vadd.f32 0.0, %v2269
        %v2271 = vpop.f32.mrb[0].mxu0
        %v2272 = vadd.f32 0.0, %v2271
        %v2273 = vpop.f32.mrb[0].mxu0
        %v2274 = vadd.f32 0.0, %v2273
        %v2275 = vpop.f32.mrb[0].mxu0
        %v2276 = vadd.f32 0.0, %v2275
        %2277 = vdwg.mxu0
        %2278 = vmatprep.subr.bf16.mxu0 %v1468
        %2279 = vmatpush1.bf16.msra.mxu0 %v1467
        %2280 = vmatprep.subr.bf16.mxu0 %v1472
        %2281 = vmatpush1.bf16.msra.mxu0 %v1471
        %2282 = vmatprep.subr.bf16.mxu0 %v1476
        %2283 = vmatpush1.bf16.msra.mxu0 %v1475
        %2284 = vmatprep.subr.bf16.mxu0 %v1480
        %2285 = vmatpush1.bf16.msra.mxu0 %v1479
        %2286 = vmatprep.subr.bf16.mxu0 %v1484
        %2287 = vmatpush1.bf16.msra.mxu0 %v1483
        %2288 = vmatprep.subr.bf16.mxu0 %v1488
        %2289 = vmatpush1.bf16.msra.mxu0 %v1487
        %2290 = vmatprep.subr.bf16.mxu0 %v1492
        %2291 = vmatpush1.bf16.msra.mxu0 %v1491
        %2292 = vmatprep.subr.bf16.mxu0 %v1496
        %2293 = vmatpush1.bf16.msra.mxu0 %v1495
        %2294 = vmatprep.subr.bf16.mxu0 %v1500
        %2295 = vmatpush1.bf16.msra.mxu0 %v1499
        %2296 = vmatprep.subr.bf16.mxu0 %v1504
        %2297 = vmatpush1.bf16.msra.mxu0 %v1503
        %2298 = vmatprep.subr.bf16.mxu0 %v1508
        %2299 = vmatpush1.bf16.msra.mxu0 %v1507
        %2300 = vmatprep.subr.bf16.mxu0 %v1512
        %2301 = vmatpush1.bf16.msra.mxu0 %v1511
        %2302 = vmatprep.subr.bf16.mxu0 %v1516
        %2303 = vmatpush1.bf16.msra.mxu0 %v1515
        %2304 = vmatprep.subr.bf16.mxu0 %v1520
        %2305 = vmatpush1.bf16.msra.mxu0 %v1519
        %2306 = vmatprep.subr.bf16.mxu0 %v1524
        %2307 = vmatpush1.bf16.msra.mxu0 %v1523
        %2308 = vmatprep.subr.bf16.mxu0 %v1528
        %2309 = vmatpush1.bf16.msra.mxu0 %v1527
        %2310 = vmatprep.mubr.bf16.mxu0 %v572
        %2311 = vmatmul.mubr.bf16.gmra.mrb[0].mxu0 %v571
        %v2312 = vpop.f32.mrb[0].mxu0
        %v2313 = vadd.f32 %v2240, %v2312
        %v2314 = vpop.f32.mrb[0].mxu0
        %v2315 = vadd.f32 %v2242, %v2314
        %v2316 = vpop.f32.mrb[0].mxu0
        %v2317 = vadd.f32 %v2244, %v2316
        %v2318 = vpop.f32.mrb[0].mxu0
        %v2319 = vadd.f32 %v2246, %v2318
        %2320 = vmatprep.mubr.bf16.mxu0 %v580
        %2321 = vmatmul.mubr.bf16.gmra.mrb[0].mxu0 %v579
        %v2322 = vpop.f32.mrb[0].mxu0
        %v2323 = vadd.f32 %v2250, %v2322
        %v2324 = vpop.f32.mrb[0].mxu0
        %v2325 = vadd.f32 %v2252, %v2324
        %v2326 = vpop.f32.mrb[0].mxu0
        %v2327 = vadd.f32 %v2254, %v2326
        %v2328 = vpop.f32.mrb[0].mxu0
        %v2329 = vadd.f32 %v2256, %v2328
        %2330 = vmatprep.mubr.bf16.mxu0 %v588
        %2331 = vmatmul.mubr.bf16.gmra.mrb[0].mxu0 %v587
        %v2332 = vpop.f32.mrb[0].mxu0
        %v2333 = vadd.f32 %v2260, %v2332
        %v2334 = vpop.f32.mrb[0].mxu0
        %v2335 = vadd.f32 %v2262, %v2334
        %v2336 = vpop.f32.mrb[0].mxu0
        %v2337 = vadd.f32 %v2264, %v2336
        %v2338 = vpop.f32.mrb[0].mxu0
        %v2339 = vadd.f32 %v2266, %v2338
        %2340 = vmatprep.mubr.bf16.mxu0 %v596
        %2341 = vmatmul.mubr.bf16.gmra.mrb[0].mxu0 %v595
        %v2342 = vpop.f32.mrb[0].mxu0
        %v2343 = vadd.f32 %v2270, %v2342
        %v2344 = vpop.f32.mrb[0].mxu0
        %v2345 = vadd.f32 %v2272, %v2344
        %v2346 = vpop.f32.mrb[0].mxu0
        %v2347 = vadd.f32 %v2274, %v2346
        %v2348 = vpop.f32.mrb[0].mxu0
        %v2349 = vadd.f32 %v2276, %v2348
        %2350 = vdwg.mxu0
        %2351 = vmatprep.subr.bf16.mxu0 %v1532
        %2352 = vmatpush1.bf16.msra.mxu0 %v1531
        %2353 = vmatprep.subr.bf16.mxu0 %v1536
        %2354 = vmatpush1.bf16.msra.mxu0 %v1535
        %2355 = vmatprep.subr.bf16.mxu0 %v1540
        %2356 = vmatpush1.bf16.msra.mxu0 %v1539
        %2357 = vmatprep.subr.bf16.mxu0 %v1544
        %2358 = vmatpush1.bf16.msra.mxu0 %v1543
        %2359 = vmatprep.subr.bf16.mxu0 %v1548
        %2360 = vmatpush1.bf16.msra.mxu0 %v1547
        %2361 = vmatprep.subr.bf16.mxu0 %v1552
        %2362 = vmatpush1.bf16.msra.mxu0 %v1551
        %2363 = vmatprep.subr.bf16.mxu0 %v1556
        %2364 = vmatpush1.bf16.msra.mxu0 %v1555
        %2365 = vmatprep.subr.bf16.mxu0 %v1560
        %2366 = vmatpush1.bf16.msra.mxu0 %v1559
        %2367 = vmatprep.subr.bf16.mxu0 %v1564
        %2368 = vmatpush1.bf16.msra.mxu0 %v1563
        %2369 = vmatprep.subr.bf16.mxu0 %v1568
        %2370 = vmatpush1.bf16.msra.mxu0 %v1567
        %2371 = vmatprep.subr.bf16.mxu0 %v1572
        %2372 = vmatpush1.bf16.msra.mxu0 %v1571
        %2373 = vmatprep.subr.bf16.mxu0 %v1576
        %2374 = vmatpush1.bf16.msra.mxu0 %v1575
        %2375 = vmatprep.subr.bf16.mxu0 %v1580
        %2376 = vmatpush1.bf16.msra.mxu0 %v1579
        %2377 = vmatprep.subr.bf16.mxu0 %v1584
        %2378 = vmatpush1.bf16.msra.mxu0 %v1583
        %2379 = vmatprep.subr.bf16.mxu0 %v1588
        %2380 = vmatpush1.bf16.msra.mxu0 %v1587
        %2381 = vmatprep.subr.bf16.mxu0 %v1592
        %2382 = vmatpush1.bf16.msra.mxu0 %v1591
        %2383 = vmatprep.mubr.bf16.mxu0 %v574
        %2384 = vmatmul.mubr.bf16.gmra.mrb[0].mxu0 %v573
        %v2385 = vpop.f32.mrb[0].mxu0
        %v2386 = vadd.f32 %v2313, %v2385
        %v2387 = vpop.f32.mrb[0].mxu0
        %v2388 = vadd.f32 %v2315, %v2387
        %v2389 = vpop.f32.mrb[0].mxu0
        %v2390 = vadd.f32 %v2317, %v2389
        %v2391 = vpop.f32.mrb[0].mxu0
        %v2392 = vadd.f32 %v2319, %v2391
        %2393 = vmatprep.mubr.bf16.mxu0 %v582
        %2394 = vmatmul.mubr.bf16.gmra.mrb[0].mxu0 %v581
        %v2395 = vpop.f32.mrb[0].mxu0
        %v2396 = vadd.f32 %v2323, %v2395
        %v2397 = vpop.f32.mrb[0].mxu0
        %v2398 = vadd.f32 %v2325, %v2397
        %v2399 = vpop.f32.mrb[0].mxu0
        %v2400 = vadd.f32 %v2327, %v2399
        %v2401 = vpop.f32.mrb[0].mxu0
        %v2402 = vadd.f32 %v2329, %v2401
        %2403 = vmatprep.mubr.bf16.mxu0 %v590
        %2404 = vmatmul.mubr.bf16.gmra.mrb[0].mxu0 %v589
        %v2405 = vpop.f32.mrb[0].mxu0
        %v2406 = vadd.f32 %v2333, %v2405
        %v2407 = vpop.f32.mrb[0].mxu0
        %v2408 = vadd.f32 %v2335, %v2407
        %v2409 = vpop.f32.mrb[0].mxu0
        %v2410 = vadd.f32 %v2337, %v2409
        %v2411 = vpop.f32.mrb[0].mxu0
        %v2412 = vadd.f32 %v2339, %v2411
        %2413 = vmatprep.mubr.bf16.mxu0 %v598
        %2414 = vmatmul.mubr.bf16.gmra.mrb[0].mxu0 %v597
        %v2415 = vpop.f32.mrb[0].mxu0
        %v2416 = vadd.f32 %v2343, %v2415
        %v2417 = vpop.f32.mrb[0].mxu0
        %v2418 = vadd.f32 %v2345, %v2417
        %v2419 = vpop.f32.mrb[0].mxu0
        %v2420 = vadd.f32 %v2347, %v2419
        %v2421 = vpop.f32.mrb[0].mxu0
        %v2422 = vadd.f32 %v2349, %v2421
        %2423 = vdwg.mxu0
        %2424 = vmatprep.subr.bf16.mxu0 %v1596
        %2425 = vmatpush1.bf16.msra.mxu0 %v1595
        %2426 = vmatprep.subr.bf16.mxu0 %v1600
        %2427 = vmatpush1.bf16.msra.mxu0 %v1599
        %2428 = vmatprep.subr.bf16.mxu0 %v1604
        %2429 = vmatpush1.bf16.msra.mxu0 %v1603
        %2430 = vmatprep.subr.bf16.mxu0 %v1608
        %2431 = vmatpush1.bf16.msra.mxu0 %v1607
        %2432 = vmatprep.subr.bf16.mxu0 %v1612
        %2433 = vmatpush1.bf16.msra.mxu0 %v1611
        %2434 = vmatprep.subr.bf16.mxu0 %v1616
        %2435 = vmatpush1.bf16.msra.mxu0 %v1615
        %2436 = vmatprep.subr.bf16.mxu0 %v1620
        %2437 = vmatpush1.bf16.msra.mxu0 %v1619
        %2438 = vmatprep.subr.bf16.mxu0 %v1624
        %2439 = vmatpush1.bf16.msra.mxu0 %v1623
        %2440 = vmatprep.subr.bf16.mxu0 %v1628
        %2441 = vmatpush1.bf16.msra.mxu0 %v1627
        %2442 = vmatprep.subr.bf16.mxu0 %v1632
        %2443 = vmatpush1.bf16.msra.mxu0 %v1631
        %2444 = vmatprep.subr.bf16.mxu0 %v1636
        %2445 = vmatpush1.bf16.msra.mxu0 %v1635
        %2446 = vmatprep.subr.bf16.mxu0 %v1640
        %2447 = vmatpush1.bf16.msra.mxu0 %v1639
        %2448 = vmatprep.subr.bf16.mxu0 %v1644
        %2449 = vmatpush1.bf16.msra.mxu0 %v1643
        %2450 = vmatprep.subr.bf16.mxu0 %v1648
        %2451 = vmatpush1.bf16.msra.mxu0 %v1647
        %2452 = vmatprep.subr.bf16.mxu0 %v1652
        %2453 = vmatpush1.bf16.msra.mxu0 %v1651
        %2454 = vmatprep.subr.bf16.mxu0 %v1656
        %2455 = vmatpush1.bf16.msra.mxu0 %v1655
        %2456 = vmatprep.mubr.bf16.mxu0 %v576
        %2457 = vmatmul.mubr.bf16.gmra.mrb[0].mxu0 %v575
        %v2458 = vpop.f32.mrb[0].mxu0
        %v2459 = vadd.f32 %v2386, %v2458
        %v2460 = vpop.f32.mrb[0].mxu0
        %v2461 = vadd.f32 %v2388, %v2460
        %v2462 = vpop.f32.mrb[0].mxu0
        %v2463 = vadd.f32 %v2390, %v2462
        %v2464 = vpop.f32.mrb[0].mxu0
        %v2465 = vadd.f32 %v2392, %v2464
        %2466 = vmatprep.mubr.bf16.mxu0 %v584
        %2467 = vmatmul.mubr.bf16.gmra.mrb[0].mxu0 %v583
        %v2468 = vpop.f32.mrb[0].mxu0
        %v2469 = vadd.f32 %v2396, %v2468
        %v2470 = vpop.f32.mrb[0].mxu0
        %v2471 = vadd.f32 %v2398, %v2470
        %v2472 = vpop.f32.mrb[0].mxu0
        %v2473 = vadd.f32 %v2400, %v2472
        %v2474 = vpop.f32.mrb[0].mxu0
        %v2475 = vadd.f32 %v2402, %v2474
        %2476 = vmatprep.mubr.bf16.mxu0 %v592
        %2477 = vmatmul.mubr.bf16.gmra.mrb[0].mxu0 %v591
        %v2478 = vpop.f32.mrb[0].mxu0
        %v2479 = vadd.f32 %v2406, %v2478
        %v2480 = vpop.f32.mrb[0].mxu0
        %v2481 = vadd.f32 %v2408, %v2480
        %v2482 = vpop.f32.mrb[0].mxu0
        %v2483 = vadd.f32 %v2410, %v2482
        %v2484 = vpop.f32.mrb[0].mxu0
        %v2485 = vadd.f32 %v2412, %v2484
        %2486 = vmatprep.mubr.bf16.mxu0 %v600
        %2487 = vmatmul.mubr.bf16.gmra.mrb[0].mxu0 %v599
        %v2488 = vpop.f32.mrb[0].mxu0
        %v2489 = vadd.f32 %v2416, %v2488
        %v2490 = vpop.f32.mrb[0].mxu0
        %v2491 = vadd.f32 %v2418, %v2490
        %v2492 = vpop.f32.mrb[0].mxu0
        %v2493 = vadd.f32 %v2420, %v2492
        %v2494 = vpop.f32.mrb[0].mxu0
        %v2495 = vadd.f32 %v2422, %v2494
        %2496 = vdwg.mxu0
        %2497 = vst [vmem:[%s169] sm:$0xff] %v2167
        %2498 = vst [vmem:[%s169 + $0x8] sm:$0xff] %v2169
        %2499 = vst [vmem:[%s169 + $0x10] sm:$0xff] %v2459
        %2500 = vst [vmem:[%s169 + $0x18] sm:$0xff] %v2461
        %2501 = vst [vmem:[%s169 + $0x20] sm:$0xff] %v2171
        %2502 = vst [vmem:[%s169 + $0x28] sm:$0xff] %v2173
        %2503 = vst [vmem:[%s169 + $0x30] sm:$0xff] %v2463
        %2504 = vst [vmem:[%s169 + $0x38] sm:$0xff] %v2465
        %2505 = vst [vmem:[%s169 + $0x40] sm:$0xff] %v2177
        %2506 = vst [vmem:[%s169 + $0x48] sm:$0xff] %v2179
        %2507 = vst [vmem:[%s169 + $0x50] sm:$0xff] %v2469
        %2508 = vst [vmem:[%s169 + $0x58] sm:$0xff] %v2471
        %2509 = vst [vmem:[%s169 + $0x60] sm:$0xff] %v2181
        %2510 = vst [vmem:[%s169 + $0x68] sm:$0xff] %v2183
        %2511 = vst [vmem:[%s169 + $0x70] sm:$0xff] %v2473
        %2512 = vst [vmem:[%s169 + $0x78] sm:$0xff] %v2475
        %2513 = vst [vmem:[%s169 + $0x80] sm:$0xff] %v2187
        %2514 = vst [vmem:[%s169 + $0x88] sm:$0xff] %v2189
        %2515 = vst [vmem:[%s169 + $0x90] sm:$0xff] %v2479
        %2516 = vst [vmem:[%s169 + $0x98] sm:$0xff] %v2481
        %2517 = vst [vmem:[%s169 + $0xa0] sm:$0xff] %v2191
        %2518 = vst [vmem:[%s169 + $0xa8] sm:$0xff] %v2193
        %2519 = vst [vmem:[%s169 + $0xb0] sm:$0xff] %v2483
        %2520 = vst [vmem:[%s169 + $0xb8] sm:$0xff] %v2485
        %2521 = vst [vmem:[%s169 + $0xc0] sm:$0xff] %v2197
        %2522 = vst [vmem:[%s169 + $0xc8] sm:$0xff] %v2199
        %2523 = vst [vmem:[%s169 + $0xd0] sm:$0xff] %v2489
        %2524 = vst [vmem:[%s169 + $0xd8] sm:$0xff] %v2491
        %2525 = vst [vmem:[%s169 + $0xe0] sm:$0xff] %v2201
        %2526 = vst [vmem:[%s169 + $0xe8] sm:$0xff] %v2203
        %2527 = vst [vmem:[%s169 + $0xf0] sm:$0xff] %v2493
        %2528 = vst [vmem:[%s169 + $0xf8] sm:$0xff] %v2495
        %s2529 = sand.u32 %s90, 1
        %s2530 = scalar_lea.sflag [#allocation3], %s2529
        %s2531 = sand.u32 %s90, 1
        %s2532 = smul.addr %s2531, 256
        %s2533 = scalar_lea.vmem [#allocation2], %s2532
        // Predicated region
        $region29: #{patch_embedding_forward.1} parent=27 // pred_check
          %p2534 = pneg %p100
        $region30: #{patch_embedding_forward.1} parent=27 // pred_check_branch
          %2536 = sbr.rel (%p2534) target = $region32
        $region31: #{patch_embedding_forward.1} parent=27 // pred_region
          %s2537 = smul.u32 8, %s20
          %s2538 = smul.u32 4, %s21
          %s2540 = ssub.s32 4096, 4096
          %2541 = vsyncadd %s2530, %s2540
          %s2542 = smul.addr %s2537, 4
          %s2543 = sadd.s32 %s2538, %s2542
          %s2544 = smul.addr %s2543, 128
          %s2545 = scalar_lea.hbm %s2, %s2544
          %s2546 = sshll.u32 %s2533, 4
          %s2547 = int_to_ptr.vmem [resolvable:$true] %s2546
          %2552 = dma.vmem_to_hbm [thread:$0]  %s2547, 4096, %s2545, %s2530, 512, 512, 32
        $region32: #{patch_embedding_forward.1} parent=27 // pred_fallthru
          _
      $region28: #{patch_embedding_forward.1} parent=5 // pred_fallthru
        _
      %p2553 = scmp.le.s32.totalorder 2, %s11
      // Predicated region
      $region33: #{patch_embedding_forward.1} parent=5 // pred_check
        %p2554 = pneg %p2553
      $region34: #{patch_embedding_forward.1} parent=5 // pred_check_branch
        %2556 = sbr.rel (%p2554) target = $region36
      $region35: #{patch_embedding_forward.1} parent=5 // pred_region
        %s2557 = ssub.s32 %s11, 2
        // Predicated region
        $region37: #{patch_embedding_forward.1} parent=35 // pred_check
          %p2558 = pneg %p106
        $region38: #{patch_embedding_forward.1} parent=35 // pred_check_branch
          %2560 = sbr.rel (%p2558) target = $region40
        $region39: #{patch_embedding_forward.1} parent=35 // pred_region
          %s2561 = sand.u32 %s91, 1
          %s2562 = scalar_lea.sflag [#allocation3], %s2561
          %s2563 = sand.u32 %s91, 1
          %s2564 = smul.addr %s2563, 256
          %s2565 = scalar_lea.vmem [#allocation2], %s2564
          %2566 = dma.done %s2562, 4096
        $region40: #{patch_embedding_forward.1} parent=35 // pred_fallthru
          _
      $region36: #{patch_embedding_forward.1} parent=5 // pred_fallthru
        _
    $region6: #{patch_embedding_forward.1} parent=1 // loop_footer
      %s15 = sadd.s32 1, %s11
    $region7: #{patch_embedding_forward.1} parent=1 // loop_footer_branch
      %10 = sbr.rel target = $region3
    $region8: #{patch_embedding_forward.1} parent=1 // loop_exit
      _
    %2567 = vsyncpa [#allocation3], 1
    %s2568 = scalar_lea.sflag [#allocation3], 1
    %2569 = vsyncpa %s2568, 1

</llo_original>
